<compile_context>
chip_gen: v6e
topology: v6e:2x2x1
jax: 0.10.0
libtpu: 0.0.40
codegen_flags: <defaults>
</compile_context>

<pallas_src>
import jax
import jax.numpy as jnp
from jax import lax
from jax.experimental import pallas as pl
from jax.experimental.pallas import tpu as pltpu

EMBEDDING_DIM = 32
NEG_INF = -1e9


# ----------------------------------------------------------------------------
# Pallas kernel: one batch element per grid step, everything resident in VMEM.
# ----------------------------------------------------------------------------
def _decoder_layer_kernel(x_ref, enc_ref, mt_ref, ms_ref,
                          wsa_ref, bsa_ref, wca_ref, bca_ref,
                          wlin_ref, blin_ref, gb_ref, out_ref):
    S_t, D = x_ref.shape[1], x_ref.shape[2]
    S_s = enc_ref.shape[1]
    scale = 1.0 / float(D) ** 0.5

    x = x_ref[0]        # (S_t, D) f32 target embeddings for this batch
    enc = enc_ref[0]    # (S_s, D) f32 encoder output for this batch

    # bf16 MXU operands, f32 accumulation (weights are already bf16).
    def mm(a, b):
        return jnp.dot(a.astype(jnp.bfloat16), b.astype(jnp.bfloat16),
                       preferred_element_type=jnp.float32)

    def scores(q, k):
        # q @ k^T via dot_general contracting last dims (no explicit transpose).
        return lax.dot_general(q.astype(jnp.bfloat16), k.astype(jnp.bfloat16),
                               (((1,), (1,)), ((), ())),
                               preferred_element_type=jnp.float32)

    def softmax(s):
        m = jnp.max(s, axis=-1, keepdims=True)
        e = jnp.exp(s - m)
        denom = jnp.sum(e, axis=-1, keepdims=True)
        return e * pl.reciprocal(denom, approx=True)   # divide on the EUP

    # ---- masks built in-kernel (no O((B*S)^2) bias inputs) ----
    key_ok_t = mt_ref[0] > 0.5                                   # (1, S_t)
    key_ok_s = ms_ref[0] > 0.5                                   # (1, S_s)
    qi = lax.broadcasted_iota(jnp.int32, (S_t, S_t), 0)
    kj = lax.broadcasted_iota(jnp.int32, (S_t, S_t), 1)
    causal_ok = kj <= qi                                         # (S_t, S_t)
    self_valid = jnp.logical_and(causal_ok, key_ok_t)            # (S_t, S_t)

    # ---- masked (causal) self-attention ----
    q1 = mm(x, wsa_ref[0]) + bsa_ref[0]
    k1 = mm(x, wsa_ref[1]) + bsa_ref[1]
    v1 = mm(x, wsa_ref[2]) + bsa_ref[2]
    s1 = jnp.where(self_valid, scores(q1, k1) * scale, NEG_INF)
    sa = mm(softmax(s1), v1)

    # ---- linear_1 + residual ----
    r1 = mm(sa, wlin_ref[0]) + blin_ref[0] + x

    # ---- cross-attention (Q from r1, K/V from encoder output) ----
    q2 = mm(r1, wca_ref[0]) + bca_ref[0]
    k2 = mm(enc, wca_ref[1]) + bca_ref[1]
    v2 = mm(enc, wca_ref[2]) + bca_ref[2]
    s2 = jnp.where(key_ok_s, scores(q2, k2) * scale, NEG_INF)
    ca = mm(softmax(s2), v2)

    # ---- linear_2 + residual ----
    r2 = mm(ca, wlin_ref[1]) + blin_ref[1] + r1

    # ---- layer norm over the embedding dim (f32) ----
    mu = jnp.mean(r2, axis=-1, keepdims=True)
    var = jnp.mean((r2 - mu) * (r2 - mu), axis=-1, keepdims=True)
    ln = (r2 - mu) * lax.rsqrt(var + 1e-5) * gb_ref[0:1, :] + gb_ref[1:2, :]

    # ---- feed-forward: linear_3 -> relu -> linear_4, + residual ----
    h = jnp.maximum(mm(ln, wlin_ref[2]) + blin_ref[2], 0.0)
    out_ref[0] = mm(h, wlin_ref[3]) + blin_ref[3] + r2


# ----------------------------------------------------------------------------
# Wrapper: per-batch grid, bf16 weights, 1-D padding masks only.
# ----------------------------------------------------------------------------
@jax.jit
def decoder_transformer_layer(x_tgt, mask_src, mask_tgt, enc_out, params):
    B, S_t, D = x_tgt.shape
    _, S_s, _ = enc_out.shape

    # ---- parameters: stacked along LEADING dims (free splits), bf16 for MXU ----
    w_sa = params["wsa"].astype(jnp.bfloat16)    # (3, D, D)  q, k, v
    b_sa = params["bsa"].astype(jnp.float32)     # (3, 1, D)
    w_ca = params["wca"].astype(jnp.bfloat16)    # (3, D, D)  q, k, v
    b_ca = params["bca"].astype(jnp.float32)     # (3, 1, D)
    w_lin = params["wlin"].astype(jnp.bfloat16)  # (4, D, D)  lin1..lin4
    b_lin = params["blin"].astype(jnp.float32)   # (4, 1, D)
    gb = jnp.concatenate([params["gamma"], params["beta"]], axis=0)  # (2, D) f32

    # padding masks as (B, 1, S) so BlockSpec tiles land on full last-two dims
    mt = mask_tgt.astype(jnp.float32).reshape(B, 1, S_t)
    ms = mask_src.astype(jnp.float32).reshape(B, 1, S_s)

    # ---- advisory cost estimate (per layer) ----
    flops = B * (2 * S_t * D * D * 8          # q,k,v,lin1, q2, lin2, lin3, lin4
                 + 2 * S_s * D * D * 2        # cross k2, v2
                 + 2 * S_t * S_t * D * 2      # self QK^T + PV
                 + 2 * S_t * S_s * D * 2)     # cross QK^T + PV
    transcendentals = B * (S_t * S_t + S_t * S_s)        # softmax exps
    bytes_accessed = sum(int(a.size) * a.dtype.itemsize for a in
                         (x_tgt, enc_out, mt, ms, w_sa, b_sa, w_ca, b_ca,
                          w_lin, b_lin, gb)) + B * S_t * D * 4

    full = lambda b: (0, 0, 0)   # weights: same block every grid step
    per_b3 = lambda b: (b, 0, 0)

    out = pl.pallas_call(
        _decoder_layer_kernel,
        out_shape=jax.ShapeDtypeStruct((B, S_t, D), jnp.float32),
        grid=(B,),
        in_specs=[
            pl.BlockSpec((1, S_t, D), per_b3),            # x_tgt
            pl.BlockSpec((1, S_s, D), per_b3),            # enc_out
            pl.BlockSpec((1, 1, S_t), per_b3),            # mask_tgt
            pl.BlockSpec((1, 1, S_s), per_b3),            # mask_src
            pl.BlockSpec((3, D, D), full),                # w_sa
            pl.BlockSpec((3, 1, D), full),                # b_sa
            pl.BlockSpec((3, D, D), full),                # w_ca
            pl.BlockSpec((3, 1, D), full),                # b_ca
            pl.BlockSpec((4, D, D), full),                # w_lin
            pl.BlockSpec((4, 1, D), full),                # b_lin
            pl.BlockSpec((2, D), lambda b: (0, 0)),       # gamma/beta
        ],
        out_specs=pl.BlockSpec((1, S_t, D), per_b3),
        compiler_params=pltpu.CompilerParams(
            dimension_semantics=("parallel",),
            vmem_limit_bytes=64 * 1024 * 1024),
        cost_estimate=pl.CostEstimate(flops=flops,
                                      transcendentals=transcendentals,
                                      bytes_accessed=bytes_accessed),
    )(x_tgt, enc_out, mt, ms, w_sa, b_sa, w_ca, b_ca, w_lin, b_lin, gb)

    return out


# ----------------------------------------------------------------------------
# Pure-JAX reference (mirrors the PyTorch forward) for a correctness check.
# ----------------------------------------------------------------------------
def reference_forward(x_tgt, mask_src, mask_tgt, enc_out, p):
    D = x_tgt.shape[-1]
    scale = 1.0 / jnp.sqrt(jnp.float32(D))

    def proj(h, w, b):
        return jnp.einsum("bsd,de->bse", h, w) + b

    def attn(q_in, kv_in, key_mask, causal, w, b):
        q = proj(q_in, w[0], b[0])
        k = proj(kv_in, w[1], b[1])
        v = proj(kv_in, w[2], b[2])
        s = jnp.einsum("bqd,bkd->bqk", q, k) * scale
        valid = (key_mask > 0.5)[:, None, :]
        if causal:
            St = q_in.shape[1]
            valid = jnp.logical_and(valid, jnp.tril(jnp.ones((St, St), bool))[None])
        s = jnp.where(valid, s, NEG_INF)
        return jnp.einsum("bqk,bkd->bqd", jax.nn.softmax(s, axis=-1), v)

    sa = attn(x_tgt, x_tgt, mask_tgt, True, p["wsa"], p["bsa"])
    r1 = jnp.einsum("bsd,de->bse", sa, p["wlin"][0]) + p["blin"][0] + x_tgt
    ca = attn(r1, enc_out, mask_src, False, p["wca"], p["bca"])
    r2 = jnp.einsum("bsd,de->bse", ca, p["wlin"][1]) + p["blin"][1] + r1
    mu = jnp.mean(r2, -1, keepdims=True)
    var = jnp.mean((r2 - mu) ** 2, -1, keepdims=True)
    ln = (r2 - mu) / jnp.sqrt(var + 1e-5) * p["gamma"][0] + p["beta"][0]
    h = jnp.maximum(jnp.einsum("bsd,de->bse", ln, p["wlin"][2]) + p["blin"][2], 0.0)
    return jnp.einsum("bsd,de->bse", h, p["wlin"][3]) + p["blin"][3] + r2


# ----------------------------------------------------------------------------
# Main
# ----------------------------------------------------------------------------
if __name__ == "__main__":
    B, S_T, S_S, D = 2, 8, 8, EMBEDDING_DIM

    key = jax.random.PRNGKey(0)
    keys = jax.random.split(key, 10)

    def init_w(k, shape):
        return (jax.random.normal(k, shape, jnp.float32) * 0.05).astype(jnp.float32)

    params = {
        "wsa": init_w(keys[0], (3, D, D)),
        "bsa": init_w(keys[1], (3, 1, D)),
        "wca": init_w(keys[2], (3, D, D)),
        "bca": init_w(keys[3], (3, 1, D)),
        "wlin": init_w(keys[4], (4, D, D)),
        "blin": init_w(keys[5], (4, 1, D)),
        "gamma": jnp.ones((1, D), jnp.float32),
        "beta": jnp.zeros((1, D), jnp.float32),
    }

    x_tgt = jax.random.normal(keys[6], (B, S_T, D), jnp.float32)
    enc_out = jax.random.normal(keys[7], (B, S_S, D), jnp.float32)
    # padding masks: mark a few trailing tokens as padding
    mask_tgt = jnp.concatenate(
        [jnp.ones((B, S_T - 2), jnp.float32), jnp.zeros((B, 2), jnp.float32)], axis=1)
    mask_src = jnp.concatenate(
        [jnp.ones((B, S_S - 1), jnp.float32), jnp.zeros((B, 1), jnp.float32)], axis=1)

    out = decoder_transformer_layer(x_tgt, mask_src, mask_tgt, enc_out, params)
    out = jax.block_until_ready(out)

    ref = reference_forward(x_tgt, mask_src, mask_tgt, enc_out, params)
    assert out.shape == (B, S_T, D)
    # tolerance covers bf16 MXU operands + EUP approximate-reciprocal softmax
    assert jnp.allclose(out, ref, atol=5e-2, rtol=5e-2), "mismatch vs reference"

    print("KERNEL_OK")
</pallas_src>

<mosaic_0001>
module attributes {stable_mosaic.version = 11 : i64} {
  func.func @_decoder_layer_kernel(%arg0: i32, %arg1: memref<1x8x32xf32, #tpu.memory_space<vmem>>, %arg2: memref<1x8x32xf32, #tpu.memory_space<vmem>>, %arg3: memref<1x1x8xf32, #tpu.memory_space<vmem>>, %arg4: memref<1x1x8xf32, #tpu.memory_space<vmem>>, %arg5: memref<3x32x32xbf16, #tpu.memory_space<vmem>>, %arg6: memref<3x1x32xf32, #tpu.memory_space<vmem>>, %arg7: memref<3x32x32xbf16, #tpu.memory_space<vmem>>, %arg8: memref<3x1x32xf32, #tpu.memory_space<vmem>>, %arg9: memref<4x32x32xbf16, #tpu.memory_space<vmem>>, %arg10: memref<4x1x32xf32, #tpu.memory_space<vmem>>, %arg11: memref<2x32xf32, #tpu.memory_space<vmem>>, %arg12: memref<1x8x32xf32, #tpu.memory_space<vmem>>) attributes {dimension_semantics = [#tpu.dimension_semantics<parallel>], iteration_bounds = array<i64: 2>, scalar_prefetch = 0 : i64, scratch_operands = 0 : i64, tpu.core_type = #tpu.core_type<tc>, window_params = [{transform_indices = @transform_0, window_bounds = array<i64: 1, 8, 32>}, {transform_indices = @transform_1, window_bounds = array<i64: 1, 8, 32>}, {transform_indices = @transform_2, window_bounds = array<i64: 1, 1, 8>}, {transform_indices = @transform_3, window_bounds = array<i64: 1, 1, 8>}, {pipeline_mode = #tpu.pipeline_mode<synchronous>, transform_indices = @transform_4, window_bounds = array<i64: 3, 32, 32>}, {pipeline_mode = #tpu.pipeline_mode<synchronous>, transform_indices = @transform_5, window_bounds = array<i64: 3, 1, 32>}, {pipeline_mode = #tpu.pipeline_mode<synchronous>, transform_indices = @transform_6, window_bounds = array<i64: 3, 32, 32>}, {pipeline_mode = #tpu.pipeline_mode<synchronous>, transform_indices = @transform_7, window_bounds = array<i64: 3, 1, 32>}, {pipeline_mode = #tpu.pipeline_mode<synchronous>, transform_indices = @transform_8, window_bounds = array<i64: 4, 32, 32>}, {pipeline_mode = #tpu.pipeline_mode<synchronous>, transform_indices = @transform_9, window_bounds = array<i64: 4, 1, 32>}, {pipeline_mode = #tpu.pipeline_mode<synchronous>, transform_indices = @transform_10, window_bounds = array<i64: 2, 32>}, {transform_indices = @transform_11, window_bounds = array<i64: 1, 8, 32>}]} {
    %c0 = arith.constant 0 : index
    %c0_0 = arith.constant 0 : index
    %c0_1 = arith.constant 0 : index
    %0 = vector.load %arg1[%c0, %c0_0, %c0_1] : memref<1x8x32xf32, #tpu.memory_space<vmem>>, vector<1x8x32xf32>
    %1 = vector.shape_cast %0 : vector<1x8x32xf32> to vector<8x32xf32>
    %c0_2 = arith.constant 0 : index
    %c0_3 = arith.constant 0 : index
    %c0_4 = arith.constant 0 : index
    %2 = vector.load %arg2[%c0_2, %c0_3, %c0_4] : memref<1x8x32xf32, #tpu.memory_space<vmem>>, vector<1x8x32xf32>
    %3 = vector.shape_cast %2 : vector<1x8x32xf32> to vector<8x32xf32>
    %c0_5 = arith.constant 0 : index
    %c0_6 = arith.constant 0 : index
    %c0_7 = arith.constant 0 : index
    %4 = vector.load %arg3[%c0_5, %c0_6, %c0_7] : memref<1x1x8xf32, #tpu.memory_space<vmem>>, vector<1x1x8xf32>
    %5 = vector.shape_cast %4 : vector<1x1x8xf32> to vector<1x8xf32>
    %cst = arith.constant 5.000000e-01 : f32
    %6 = vector.broadcast %cst : f32 to vector<1x8xf32>
    %7 = arith.cmpf ogt, %5, %6 : vector<1x8xf32>
    %c0_8 = arith.constant 0 : index
    %c0_9 = arith.constant 0 : index
    %c0_10 = arith.constant 0 : index
    %8 = vector.load %arg4[%c0_8, %c0_9, %c0_10] : memref<1x1x8xf32, #tpu.memory_space<vmem>>, vector<1x1x8xf32>
    %9 = vector.shape_cast %8 : vector<1x1x8xf32> to vector<1x8xf32>
    %cst_11 = arith.constant 5.000000e-01 : f32
    %10 = vector.broadcast %cst_11 : f32 to vector<1x8xf32>
    %11 = arith.cmpf ogt, %9, %10 : vector<1x8xf32>
    %12 = tpu.iota {dimensions = array<i32: 0>} : vector<8x8xi32>
    %13 = tpu.iota {dimensions = array<i32: 1>} : vector<8x8xi32>
    %14 = arith.cmpi sle, %13, %12 : vector<8x8xi32>
    %15 = vector.broadcast %7 : vector<1x8xi1> to vector<8x8xi1>
    %16 = arith.andi %14, %15 : vector<8x8xi1>
    %c0_12 = arith.constant 0 : index
    %c0_13 = arith.constant 0 : index
    %c0_14 = arith.constant 0 : index
    %17 = vector.load %arg5[%c0_12, %c0_13, %c0_14] : memref<3x32x32xbf16, #tpu.memory_space<vmem>>, vector<1x32x32xbf16>
    %18 = vector.shape_cast %17 : vector<1x32x32xbf16> to vector<32x32xbf16>
    %19 = arith.truncf %1 : vector<8x32xf32> to vector<8x32xbf16>
    %cst_15 = arith.constant dense<0.000000e+00> : vector<8x32xf32>
    %20 = tpu.matmul %19, %18, %cst_15 {dimension_numbers = #tpu.dot_dimension_numbers<[1], [0], [0], [1], [0, 0, 1, 1], [], []>} : vector<8x32xbf16>, vector<32x32xbf16>, vector<8x32xf32> -> vector<8x32xf32>
    %c0_16 = arith.constant 0 : index
    %c0_17 = arith.constant 0 : index
    %c0_18 = arith.constant 0 : index
    %21 = vector.load %arg6[%c0_16, %c0_17, %c0_18] : memref<3x1x32xf32, #tpu.memory_space<vmem>>, vector<1x1x32xf32>
    %22 = vector.shape_cast %21 : vector<1x1x32xf32> to vector<1x32xf32>
    %23 = vector.broadcast %22 : vector<1x32xf32> to vector<8x32xf32>
    %24 = arith.addf %20, %23 : vector<8x32xf32>
    %c1 = arith.constant 1 : index
    %c0_19 = arith.constant 0 : index
    %c0_20 = arith.constant 0 : index
    %25 = vector.load %arg5[%c1, %c0_19, %c0_20] : memref<3x32x32xbf16, #tpu.memory_space<vmem>>, vector<1x32x32xbf16>
    %26 = vector.shape_cast %25 : vector<1x32x32xbf16> to vector<32x32xbf16>
    %27 = arith.truncf %1 : vector<8x32xf32> to vector<8x32xbf16>
    %cst_21 = arith.constant dense<0.000000e+00> : vector<8x32xf32>
    %28 = tpu.matmul %27, %26, %cst_21 {dimension_numbers = #tpu.dot_dimension_numbers<[1], [0], [0], [1], [0, 0, 1, 1], [], []>} : vector<8x32xbf16>, vector<32x32xbf16>, vector<8x32xf32> -> vector<8x32xf32>
    %c1_22 = arith.constant 1 : index
    %c0_23 = arith.constant 0 : index
    %c0_24 = arith.constant 0 : index
    %29 = vector.load %arg6[%c1_22, %c0_23, %c0_24] : memref<3x1x32xf32, #tpu.memory_space<vmem>>, vector<1x1x32xf32>
    %30 = vector.shape_cast %29 : vector<1x1x32xf32> to vector<1x32xf32>
    %31 = vector.broadcast %30 : vector<1x32xf32> to vector<8x32xf32>
    %32 = arith.addf %28, %31 : vector<8x32xf32>
    %c2 = arith.constant 2 : index
    %c0_25 = arith.constant 0 : index
    %c0_26 = arith.constant 0 : index
    %33 = vector.load %arg5[%c2, %c0_25, %c0_26] : memref<3x32x32xbf16, #tpu.memory_space<vmem>>, vector<1x32x32xbf16>
    %34 = vector.shape_cast %33 : vector<1x32x32xbf16> to vector<32x32xbf16>
    %35 = arith.truncf %1 : vector<8x32xf32> to vector<8x32xbf16>
    %cst_27 = arith.constant dense<0.000000e+00> : vector<8x32xf32>
    %36 = tpu.matmul %35, %34, %cst_27 {dimension_numbers = #tpu.dot_dimension_numbers<[1], [0], [0], [1], [0, 0, 1, 1], [], []>} : vector<8x32xbf16>, vector<32x32xbf16>, vector<8x32xf32> -> vector<8x32xf32>
    %c2_28 = arith.constant 2 : index
    %c0_29 = arith.constant 0 : index
    %c0_30 = arith.constant 0 : index
    %37 = vector.load %arg6[%c2_28, %c0_29, %c0_30] : memref<3x1x32xf32, #tpu.memory_space<vmem>>, vector<1x1x32xf32>
    %38 = vector.shape_cast %37 : vector<1x1x32xf32> to vector<1x32xf32>
    %39 = vector.broadcast %38 : vector<1x32xf32> to vector<8x32xf32>
    %40 = arith.addf %36, %39 : vector<8x32xf32>
    %41 = arith.truncf %24 : vector<8x32xf32> to vector<8x32xbf16>
    %42 = arith.truncf %32 : vector<8x32xf32> to vector<8x32xbf16>
    %cst_31 = arith.constant dense<0.000000e+00> : vector<8x8xf32>
    %43 = tpu.matmul %41, %42, %cst_31 {dimension_numbers = #tpu.dot_dimension_numbers<[1], [1], [0], [0], [0, 0, 1, 0], [], []>} : vector<8x32xbf16>, vector<8x32xbf16>, vector<8x8xf32> -> vector<8x8xf32>
    %cst_32 = arith.constant 0.176776692 : f32
    %44 = vector.broadcast %cst_32 : f32 to vector<8x8xf32>
    %45 = arith.mulf %43, %44 : vector<8x8xf32>
    %cst_33 = arith.constant -1.000000e+09 : f32
    %46 = vector.broadcast %cst_33 : f32 to vector<8x8xf32>
    %47 = arith.select %16, %45, %46 : vector<8x8xi1>, vector<8x8xf32>
    %cst_34 = arith.constant dense<0xFF800000> : vector<8xf32>
    %48 = vector.multi_reduction <maximumf>, %47, %cst_34 [1] : vector<8x8xf32> to vector<8xf32>
    %49 = vector.shape_cast %48 : vector<8xf32> to vector<8x1xf32>
    %50 = vector.broadcast %49 : vector<8x1xf32> to vector<8x8xf32>
    %51 = arith.subf %47, %50 : vector<8x8xf32>
    %52 = math.exp %51 : vector<8x8xf32>
    %cst_35 = arith.constant dense<0.000000e+00> : vector<8xf32>
    %53 = vector.multi_reduction <add>, %52, %cst_35 [1] : vector<8x8xf32> to vector<8xf32>
    %54 = vector.shape_cast %53 : vector<8xf32> to vector<8x1xf32>
    %55 = tpu.reciprocal %54 {approx = true} : vector<8x1xf32> -> vector<8x1xf32>
    %56 = vector.broadcast %55 : vector<8x1xf32> to vector<8x8xf32>
    %57 = arith.mulf %52, %56 : vector<8x8xf32>
    %58 = arith.truncf %57 : vector<8x8xf32> to vector<8x8xbf16>
    %59 = arith.truncf %40 : vector<8x32xf32> to vector<8x32xbf16>
    %cst_36 = arith.constant dense<0.000000e+00> : vector<8x32xf32>
    %60 = tpu.matmul %58, %59, %cst_36 {dimension_numbers = #tpu.dot_dimension_numbers<[1], [0], [0], [1], [0, 0, 1, 1], [], []>} : vector<8x8xbf16>, vector<8x32xbf16>, vector<8x32xf32> -> vector<8x32xf32>
    %c0_37 = arith.constant 0 : index
    %c0_38 = arith.constant 0 : index
    %c0_39 = arith.constant 0 : index
    %61 = vector.load %arg9[%c0_37, %c0_38, %c0_39] : memref<4x32x32xbf16, #tpu.memory_space<vmem>>, vector<1x32x32xbf16>
    %62 = vector.shape_cast %61 : vector<1x32x32xbf16> to vector<32x32xbf16>
    %63 = arith.truncf %60 : vector<8x32xf32> to vector<8x32xbf16>
    %cst_40 = arith.constant dense<0.000000e+00> : vector<8x32xf32>
    %64 = tpu.matmul %63, %62, %cst_40 {dimension_numbers = #tpu.dot_dimension_numbers<[1], [0], [0], [1], [0, 0, 1, 1], [], []>} : vector<8x32xbf16>, vector<32x32xbf16>, vector<8x32xf32> -> vector<8x32xf32>
    %c0_41 = arith.constant 0 : index
    %c0_42 = arith.constant 0 : index
    %c0_43 = arith.constant 0 : index
    %65 = vector.load %arg10[%c0_41, %c0_42, %c0_43] : memref<4x1x32xf32, #tpu.memory_space<vmem>>, vector<1x1x32xf32>
    %66 = vector.shape_cast %65 : vector<1x1x32xf32> to vector<1x32xf32>
    %67 = vector.broadcast %66 : vector<1x32xf32> to vector<8x32xf32>
    %68 = arith.addf %64, %67 : vector<8x32xf32>
    %69 = arith.addf %68, %1 : vector<8x32xf32>
    %c0_44 = arith.constant 0 : index
    %c0_45 = arith.constant 0 : index
    %c0_46 = arith.constant 0 : index
    %70 = vector.load %arg7[%c0_44, %c0_45, %c0_46] : memref<3x32x32xbf16, #tpu.memory_space<vmem>>, vector<1x32x32xbf16>
    %71 = vector.shape_cast %70 : vector<1x32x32xbf16> to vector<32x32xbf16>
    %72 = arith.truncf %69 : vector<8x32xf32> to vector<8x32xbf16>
    %cst_47 = arith.constant dense<0.000000e+00> : vector<8x32xf32>
    %73 = tpu.matmul %72, %71, %cst_47 {dimension_numbers = #tpu.dot_dimension_numbers<[1], [0], [0], [1], [0, 0, 1, 1], [], []>} : vector<8x32xbf16>, vector<32x32xbf16>, vector<8x32xf32> -> vector<8x32xf32>
    %c0_48 = arith.constant 0 : index
    %c0_49 = arith.constant 0 : index
    %c0_50 = arith.constant 0 : index
    %74 = vector.load %arg8[%c0_48, %c0_49, %c0_50] : memref<3x1x32xf32, #tpu.memory_space<vmem>>, vector<1x1x32xf32>
    %75 = vector.shape_cast %74 : vector<1x1x32xf32> to vector<1x32xf32>
    %76 = vector.broadcast %75 : vector<1x32xf32> to vector<8x32xf32>
    %77 = arith.addf %73, %76 : vector<8x32xf32>
    %c1_51 = arith.constant 1 : index
    %c0_52 = arith.constant 0 : index
    %c0_53 = arith.constant 0 : index
    %78 = vector.load %arg7[%c1_51, %c0_52, %c0_53] : memref<3x32x32xbf16, #tpu.memory_space<vmem>>, vector<1x32x32xbf16>
    %79 = vector.shape_cast %78 : vector<1x32x32xbf16> to vector<32x32xbf16>
    %80 = arith.truncf %3 : vector<8x32xf32> to vector<8x32xbf16>
    %cst_54 = arith.constant dense<0.000000e+00> : vector<8x32xf32>
    %81 = tpu.matmul %80, %79, %cst_54 {dimension_numbers = #tpu.dot_dimension_numbers<[1], [0], [0], [1], [0, 0, 1, 1], [], []>} : vector<8x32xbf16>, vector<32x32xbf16>, vector<8x32xf32> -> vector<8x32xf32>
    %c1_55 = arith.constant 1 : index
    %c0_56 = arith.constant 0 : index
    %c0_57 = arith.constant 0 : index
    %82 = vector.load %arg8[%c1_55, %c0_56, %c0_57] : memref<3x1x32xf32, #tpu.memory_space<vmem>>, vector<1x1x32xf32>
    %83 = vector.shape_cast %82 : vector<1x1x32xf32> to vector<1x32xf32>
    %84 = vector.broadcast %83 : vector<1x32xf32> to vector<8x32xf32>
    %85 = arith.addf %81, %84 : vector<8x32xf32>
    %c2_58 = arith.constant 2 : index
    %c0_59 = arith.constant 0 : index
    %c0_60 = arith.constant 0 : index
    %86 = vector.load %arg7[%c2_58, %c0_59, %c0_60] : memref<3x32x32xbf16, #tpu.memory_space<vmem>>, vector<1x32x32xbf16>
    %87 = vector.shape_cast %86 : vector<1x32x32xbf16> to vector<32x32xbf16>
    %88 = arith.truncf %3 : vector<8x32xf32> to vector<8x32xbf16>
    %cst_61 = arith.constant dense<0.000000e+00> : vector<8x32xf32>
    %89 = tpu.matmul %88, %87, %cst_61 {dimension_numbers = #tpu.dot_dimension_numbers<[1], [0], [0], [1], [0, 0, 1, 1], [], []>} : vector<8x32xbf16>, vector<32x32xbf16>, vector<8x32xf32> -> vector<8x32xf32>
    %c2_62 = arith.constant 2 : index
    %c0_63 = arith.constant 0 : index
    %c0_64 = arith.constant 0 : index
    %90 = vector.load %arg8[%c2_62, %c0_63, %c0_64] : memref<3x1x32xf32, #tpu.memory_space<vmem>>, vector<1x1x32xf32>
    %91 = vector.shape_cast %90 : vector<1x1x32xf32> to vector<1x32xf32>
    %92 = vector.broadcast %91 : vector<1x32xf32> to vector<8x32xf32>
    %93 = arith.addf %89, %92 : vector<8x32xf32>
    %94 = arith.truncf %77 : vector<8x32xf32> to vector<8x32xbf16>
    %95 = arith.truncf %85 : vector<8x32xf32> to vector<8x32xbf16>
    %cst_65 = arith.constant dense<0.000000e+00> : vector<8x8xf32>
    %96 = tpu.matmul %94, %95, %cst_65 {dimension_numbers = #tpu.dot_dimension_numbers<[1], [1], [0], [0], [0, 0, 1, 0], [], []>} : vector<8x32xbf16>, vector<8x32xbf16>, vector<8x8xf32> -> vector<8x8xf32>
    %cst_66 = arith.constant 0.176776692 : f32
    %97 = vector.broadcast %cst_66 : f32 to vector<8x8xf32>
    %98 = arith.mulf %96, %97 : vector<8x8xf32>
    %cst_67 = arith.constant -1.000000e+09 : f32
    %99 = vector.shape_cast %11 : vector<1x8xi1> to vector<1x8xi1>
    %100 = vector.broadcast %99 : vector<1x8xi1> to vector<8x8xi1>
    %101 = vector.broadcast %cst_67 : f32 to vector<8x8xf32>
    %102 = arith.select %100, %98, %101 : vector<8x8xi1>, vector<8x8xf32>
    %cst_68 = arith.constant dense<0xFF800000> : vector<8xf32>
    %103 = vector.multi_reduction <maximumf>, %102, %cst_68 [1] : vector<8x8xf32> to vector<8xf32>
    %104 = vector.shape_cast %103 : vector<8xf32> to vector<8x1xf32>
    %105 = vector.broadcast %104 : vector<8x1xf32> to vector<8x8xf32>
    %106 = arith.subf %102, %105 : vector<8x8xf32>
    %107 = math.exp %106 : vector<8x8xf32>
    %cst_69 = arith.constant dense<0.000000e+00> : vector<8xf32>
    %108 = vector.multi_reduction <add>, %107, %cst_69 [1] : vector<8x8xf32> to vector<8xf32>
    %109 = vector.shape_cast %108 : vector<8xf32> to vector<8x1xf32>
    %110 = tpu.reciprocal %109 {approx = true} : vector<8x1xf32> -> vector<8x1xf32>
    %111 = vector.broadcast %110 : vector<8x1xf32> to vector<8x8xf32>
    %112 = arith.mulf %107, %111 : vector<8x8xf32>
    %113 = arith.truncf %112 : vector<8x8xf32> to vector<8x8xbf16>
    %114 = arith.truncf %93 : vector<8x32xf32> to vector<8x32xbf16>
    %cst_70 = arith.constant dense<0.000000e+00> : vector<8x32xf32>
    %115 = tpu.matmul %113, %114, %cst_70 {dimension_numbers = #tpu.dot_dimension_numbers<[1], [0], [0], [1], [0, 0, 1, 1], [], []>} : vector<8x8xbf16>, vector<8x32xbf16>, vector<8x32xf32> -> vector<8x32xf32>
    %c1_71 = arith.constant 1 : index
    %c0_72 = arith.constant 0 : index
    %c0_73 = arith.constant 0 : index
    %116 = vector.load %arg9[%c1_71, %c0_72, %c0_73] : memref<4x32x32xbf16, #tpu.memory_space<vmem>>, vector<1x32x32xbf16>
    %117 = vector.shape_cast %116 : vector<1x32x32xbf16> to vector<32x32xbf16>
    %118 = arith.truncf %115 : vector<8x32xf32> to vector<8x32xbf16>
    %cst_74 = arith.constant dense<0.000000e+00> : vector<8x32xf32>
    %119 = tpu.matmul %118, %117, %cst_74 {dimension_numbers = #tpu.dot_dimension_numbers<[1], [0], [0], [1], [0, 0, 1, 1], [], []>} : vector<8x32xbf16>, vector<32x32xbf16>, vector<8x32xf32> -> vector<8x32xf32>
    %c1_75 = arith.constant 1 : index
    %c0_76 = arith.constant 0 : index
    %c0_77 = arith.constant 0 : index
    %120 = vector.load %arg10[%c1_75, %c0_76, %c0_77] : memref<4x1x32xf32, #tpu.memory_space<vmem>>, vector<1x1x32xf32>
    %121 = vector.shape_cast %120 : vector<1x1x32xf32> to vector<1x32xf32>
    %122 = vector.broadcast %121 : vector<1x32xf32> to vector<8x32xf32>
    %123 = arith.addf %119, %122 : vector<8x32xf32>
    %124 = arith.addf %123, %69 : vector<8x32xf32>
    %cst_78 = arith.constant dense<0.000000e+00> : vector<8xf32>
    %125 = vector.multi_reduction <add>, %124, %cst_78 [1] : vector<8x32xf32> to vector<8xf32>
    %126 = vector.shape_cast %125 : vector<8xf32> to vector<8x1xf32>
    %cst_79 = arith.constant 3.200000e+01 : f32
    %127 = vector.broadcast %cst_79 : f32 to vector<8x1xf32>
    %128 = arith.divf %126, %127 : vector<8x1xf32>
    %129 = vector.broadcast %128 : vector<8x1xf32> to vector<8x32xf32>
    %130 = arith.subf %124, %129 : vector<8x32xf32>
    %131 = vector.broadcast %128 : vector<8x1xf32> to vector<8x32xf32>
    %132 = arith.subf %124, %131 : vector<8x32xf32>
    %133 = arith.mulf %130, %132 : vector<8x32xf32>
    %cst_80 = arith.constant dense<0.000000e+00> : vector<8xf32>
    %134 = vector.multi_reduction <add>, %133, %cst_80 [1] : vector<8x32xf32> to vector<8xf32>
    %135 = vector.shape_cast %134 : vector<8xf32> to vector<8x1xf32>
    %cst_81 = arith.constant 3.200000e+01 : f32
    %136 = vector.broadcast %cst_81 : f32 to vector<8x1xf32>
    %137 = arith.divf %135, %136 : vector<8x1xf32>
    %138 = vector.broadcast %128 : vector<8x1xf32> to vector<8x32xf32>
    %139 = arith.subf %124, %138 : vector<8x32xf32>
    %cst_82 = arith.constant 9.99999974E-6 : f32
    %140 = vector.broadcast %cst_82 : f32 to vector<8x1xf32>
    %141 = arith.addf %137, %140 : vector<8x1xf32>
    %142 = math.rsqrt %141 : vector<8x1xf32>
    %143 = vector.broadcast %142 : vector<8x1xf32> to vector<8x32xf32>
    %144 = arith.mulf %139, %143 : vector<8x32xf32>
    %c0_83 = arith.constant 0 : index
    %c0_84 = arith.constant 0 : index
    %145 = vector.load %arg11[%c0_83, %c0_84] : memref<2x32xf32, #tpu.memory_space<vmem>>, vector<1x32xf32>
    %146 = vector.broadcast %145 : vector<1x32xf32> to vector<8x32xf32>
    %147 = arith.mulf %144, %146 : vector<8x32xf32>
    %c1_85 = arith.constant 1 : index
    %c0_86 = arith.constant 0 : index
    %148 = vector.load %arg11[%c1_85, %c0_86] : memref<2x32xf32, #tpu.memory_space<vmem>>, vector<1x32xf32>
    %149 = vector.broadcast %148 : vector<1x32xf32> to vector<8x32xf32>
    %150 = arith.addf %147, %149 : vector<8x32xf32>
    %c2_87 = arith.constant 2 : index
    %c0_88 = arith.constant 0 : index
    %c0_89 = arith.constant 0 : index
    %151 = vector.load %arg9[%c2_87, %c0_88, %c0_89] : memref<4x32x32xbf16, #tpu.memory_space<vmem>>, vector<1x32x32xbf16>
    %152 = vector.shape_cast %151 : vector<1x32x32xbf16> to vector<32x32xbf16>
    %153 = arith.truncf %150 : vector<8x32xf32> to vector<8x32xbf16>
    %cst_90 = arith.constant dense<0.000000e+00> : vector<8x32xf32>
    %154 = tpu.matmul %153, %152, %cst_90 {dimension_numbers = #tpu.dot_dimension_numbers<[1], [0], [0], [1], [0, 0, 1, 1], [], []>} : vector<8x32xbf16>, vector<32x32xbf16>, vector<8x32xf32> -> vector<8x32xf32>
    %c2_91 = arith.constant 2 : index
    %c0_92 = arith.constant 0 : index
    %c0_93 = arith.constant 0 : index
    %155 = vector.load %arg10[%c2_91, %c0_92, %c0_93] : memref<4x1x32xf32, #tpu.memory_space<vmem>>, vector<1x1x32xf32>
    %156 = vector.shape_cast %155 : vector<1x1x32xf32> to vector<1x32xf32>
    %157 = vector.broadcast %156 : vector<1x32xf32> to vector<8x32xf32>
    %158 = arith.addf %154, %157 : vector<8x32xf32>
    %cst_94 = arith.constant 0.000000e+00 : f32
    %159 = vector.broadcast %cst_94 : f32 to vector<8x32xf32>
    %160 = arith.maximumf %158, %159 : vector<8x32xf32>
    %c3 = arith.constant 3 : index
    %c0_95 = arith.constant 0 : index
    %c0_96 = arith.constant 0 : index
    %161 = vector.load %arg9[%c3, %c0_95, %c0_96] : memref<4x32x32xbf16, #tpu.memory_space<vmem>>, vector<1x32x32xbf16>
    %162 = vector.shape_cast %161 : vector<1x32x32xbf16> to vector<32x32xbf16>
    %163 = arith.truncf %160 : vector<8x32xf32> to vector<8x32xbf16>
    %cst_97 = arith.constant dense<0.000000e+00> : vector<8x32xf32>
    %164 = tpu.matmul %163, %162, %cst_97 {dimension_numbers = #tpu.dot_dimension_numbers<[1], [0], [0], [1], [0, 0, 1, 1], [], []>} : vector<8x32xbf16>, vector<32x32xbf16>, vector<8x32xf32> -> vector<8x32xf32>
    %c3_98 = arith.constant 3 : index
    %c0_99 = arith.constant 0 : index
    %c0_100 = arith.constant 0 : index
    %165 = vector.load %arg10[%c3_98, %c0_99, %c0_100] : memref<4x1x32xf32, #tpu.memory_space<vmem>>, vector<1x1x32xf32>
    %166 = vector.shape_cast %165 : vector<1x1x32xf32> to vector<1x32xf32>
    %167 = vector.broadcast %166 : vector<1x32xf32> to vector<8x32xf32>
    %168 = arith.addf %164, %167 : vector<8x32xf32>
    %169 = arith.addf %168, %124 : vector<8x32xf32>
    %c0_101 = arith.constant 0 : index
    %c0_102 = arith.constant 0 : index
    %c0_103 = arith.constant 0 : index
    %170 = vector.load %arg12[%c0_101, %c0_102, %c0_103] : memref<1x8x32xf32, #tpu.memory_space<vmem>>, vector<1x8x32xf32>
    %171 = vector.shape_cast %170 : vector<1x8x32xf32> to vector<8x32xf32>
    %172 = vector.shape_cast %169 : vector<8x32xf32> to vector<1x8x32xf32>
    tpu.vector_store %arg12[%c0_101, %c0_102, %c0_103], %172 {strides = array<i32>} : memref<1x8x32xf32, #tpu.memory_space<vmem>>, vector<1x8x32xf32>,
    return
  }
  func.func @transform_0(%arg0: i32) -> (i32, i32, i32) {
    %c0_i32 = arith.constant 0 : i32
    %c0_i32_0 = arith.constant 0 : i32
    %c0_i32_1 = arith.constant 0 : i32
    return %arg0, %c0_i32, %c0_i32_0 : i32, i32, i32
  }
  func.func @transform_1(%arg0: i32) -> (i32, i32, i32) {
    %c0_i32 = arith.constant 0 : i32
    %c0_i32_0 = arith.constant 0 : i32
    %c0_i32_1 = arith.constant 0 : i32
    return %arg0, %c0_i32, %c0_i32_0 : i32, i32, i32
  }
  func.func @transform_2(%arg0: i32) -> (i32, i32, i32) {
    %c0_i32 = arith.constant 0 : i32
    %c0_i32_0 = arith.constant 0 : i32
    %c0_i32_1 = arith.constant 0 : i32
    return %arg0, %c0_i32, %c0_i32_0 : i32, i32, i32
  }
  func.func @transform_3(%arg0: i32) -> (i32, i32, i32) {
    %c0_i32 = arith.constant 0 : i32
    %c0_i32_0 = arith.constant 0 : i32
    %c0_i32_1 = arith.constant 0 : i32
    return %arg0, %c0_i32, %c0_i32_0 : i32, i32, i32
  }
  func.func @transform_4(%arg0: i32) -> (i32, i32, i32) {
    %c0_i32 = arith.constant 0 : i32
    %c0_i32_0 = arith.constant 0 : i32
    %c0_i32_1 = arith.constant 0 : i32
    %c0_i32_2 = arith.constant 0 : i32
    return %c0_i32, %c0_i32_0, %c0_i32_1 : i32, i32, i32
  }
  func.func @transform_5(%arg0: i32) -> (i32, i32, i32) {
    %c0_i32 = arith.constant 0 : i32
    %c0_i32_0 = arith.constant 0 : i32
    %c0_i32_1 = arith.constant 0 : i32
    %c0_i32_2 = arith.constant 0 : i32
    return %c0_i32, %c0_i32_0, %c0_i32_1 : i32, i32, i32
  }
  func.func @transform_6(%arg0: i32) -> (i32, i32, i32) {
    %c0_i32 = arith.constant 0 : i32
    %c0_i32_0 = arith.constant 0 : i32
    %c0_i32_1 = arith.constant 0 : i32
    %c0_i32_2 = arith.constant 0 : i32
    return %c0_i32, %c0_i32_0, %c0_i32_1 : i32, i32, i32
  }
  func.func @transform_7(%arg0: i32) -> (i32, i32, i32) {
    %c0_i32 = arith.constant 0 : i32
    %c0_i32_0 = arith.constant 0 : i32
    %c0_i32_1 = arith.constant 0 : i32
    %c0_i32_2 = arith.constant 0 : i32
    return %c0_i32, %c0_i32_0, %c0_i32_1 : i32, i32, i32
  }
  func.func @transform_8(%arg0: i32) -> (i32, i32, i32) {
    %c0_i32 = arith.constant 0 : i32
    %c0_i32_0 = arith.constant 0 : i32
    %c0_i32_1 = arith.constant 0 : i32
    %c0_i32_2 = arith.constant 0 : i32
    return %c0_i32, %c0_i32_0, %c0_i32_1 : i32, i32, i32
  }
  func.func @transform_9(%arg0: i32) -> (i32, i32, i32) {
    %c0_i32 = arith.constant 0 : i32
    %c0_i32_0 = arith.constant 0 : i32
    %c0_i32_1 = arith.constant 0 : i32
    %c0_i32_2 = arith.constant 0 : i32
    return %c0_i32, %c0_i32_0, %c0_i32_1 : i32, i32, i32
  }
  func.func @transform_10(%arg0: i32) -> (i32, i32) {
    %c0_i32 = arith.constant 0 : i32
    %c0_i32_0 = arith.constant 0 : i32
    %c0_i32_1 = arith.constant 0 : i32
    return %c0_i32, %c0_i32_0 : i32, i32
  }
  func.func @transform_11(%arg0: i32) -> (i32, i32, i32) {
    %c0_i32 = arith.constant 0 : i32
    %c0_i32_0 = arith.constant 0 : i32
    %c0_i32_1 = arith.constant 0 : i32
    return %arg0, %c0_i32, %c0_i32_0 : i32, i32, i32
  }
}

</mosaic_0001>

<llo_original>
// kernel: decoder_transformer_layer.1
$region0: #{decoder_transformer_layer.1}
  #allocation0 [shape = 'u32[]', space=smem, size = 0x4, offset = 0x4, fixed_abs, tag = 'smem constant byte address 0x4 - core index']
  #allocation1 [shape = 'u32[144,128]{1,0:T(1,128)}', space=vmem, size = 0x12000, scoped, tag = 'internal scratch']
  %s0 = inlined_call_operand.vmem [shape: f32[2,8,32], index: 0, kind: input, shape index: {}]
  %s1 = inlined_call_operand.vmem [shape: f32[2,8,32], index: 1, kind: input, shape index: {}]
  %s2 = inlined_call_operand.vmem [shape: f32[2,1,8], index: 2, kind: input, shape index: {}]
  %s3 = inlined_call_operand.vmem [shape: f32[2,1,8], index: 3, kind: input, shape index: {}]
  %s4 = inlined_call_operand.vmem [shape: bf16[3,32,32], index: 4, kind: input, shape index: {}]
  %s5 = inlined_call_operand.vmem [shape: f32[3,1,32], index: 5, kind: input, shape index: {}]
  %s6 = inlined_call_operand.vmem [shape: bf16[3,32,32], index: 6, kind: input, shape index: {}]
  %s7 = inlined_call_operand.vmem [shape: f32[3,1,32], index: 7, kind: input, shape index: {}]
  %s8 = inlined_call_operand.vmem [shape: bf16[4,32,32], index: 8, kind: input, shape index: {}]
  %s9 = inlined_call_operand.vmem [shape: f32[4,1,32], index: 9, kind: input, shape index: {}]
  %s10 = inlined_call_operand.vmem [shape: f32[2,32], index: 10, kind: input, shape index: {}]
  %s11 = inlined_call_operand.hbm [shape: f32[2,8,32], index: 11, kind: output, shape index: {}]
  %s12 = sld [smem:[#allocation0]]
  $region77: #{decoder_transformer_layer.1} parent=0
    _
  %s14 = ssub.s32 1, %s12
  %s15 = scalar_select 0, %s14, %s12
  $region1: #{decoder_transformer_layer.1} parent=0
    #allocation2 [shape = 'u8[8192]{0}', space=vmem, size = 0x2000, scoped, tag = 'output window, operand 0']
    #allocation3 [shape = 's32[2]{0}', space=sflag, size = 0x8, scoped, tag = 'scoped memory for decoder_transformer_layer.1']
    %16 = vsyncpa [#allocation3], 0
    %s17 = scalar_lea.sflag [#allocation3], 1
    %18 = vsyncpa %s17, 0
    loop: start=0, step=1, limit=4
    $region2: #{decoder_transformer_layer.1} parent=1 // loop_pre_header
      _
    $region3: #{decoder_transformer_layer.1} parent=1 // loop_header
      %s20 = sphi 0, %s24
      %p21 = scmp.ge.s32.totalorder %s20, 4
      %s30 = sphi 0, %s32
      %s33 = sphi 0, %s30
      %s34 = sphi 0, %s33
      %s50 = sphi 0, %s34
      %s56 = sphi 0, %s58
      %s59 = sphi 0, %s56
      %s60 = sphi 0, %s59
      %s76 = sphi 0, %s60
      %s82 = sphi 0, %s84
      %s85 = sphi 0, %s82
      %s86 = sphi 0, %s85
      %s102 = sphi 0, %s86
      %s108 = sphi 0, %s110
      %s111 = sphi 0, %s108
      %s112 = sphi 0, %s111
      %s128 = sphi 0, %s112
      %s132 = sphi 0, %s132
      %s134 = sphi 0, %s132
      %s135 = sphi 0, %s134
      %s149 = sphi 0, %s135
      %s153 = sphi 0, %s153
      %s155 = sphi 0, %s153
      %s156 = sphi 0, %s155
      %s170 = sphi 0, %s156
      %s174 = sphi 0, %s174
      %s176 = sphi 0, %s174
      %s177 = sphi 0, %s176
      %s191 = sphi 0, %s177
      %s195 = sphi 0, %s195
      %s197 = sphi 0, %s195
      %s198 = sphi 0, %s197
      %s212 = sphi 0, %s198
      %s216 = sphi 0, %s216
      %s218 = sphi 0, %s216
      %s219 = sphi 0, %s218
      %s233 = sphi 0, %s219
      %s237 = sphi 0, %s237
      %s239 = sphi 0, %s237
      %s240 = sphi 0, %s239
      %s254 = sphi 0, %s240
      %s258 = sphi 0, %s258
      %s260 = sphi 0, %s258
      %s261 = sphi 0, %s260
      %s275 = sphi 0, %s261
      %s281 = sphi 0, %s283
      %s284 = sphi 0, %s281
      %s285 = sphi 0, %s284
      %s301 = sphi 0, %s285
    $region4: #{decoder_transformer_layer.1} parent=1 // loop_header_branch
      %23 = sbr.rel (%p21) target = $region8
    $region5: #{decoder_transformer_layer.1} parent=1 // loop_body
      %s25 = ssub.s32 %s20, 1
      %s26 = ssub.s32 %s20, 2
      %s27 = sadd.s32 %s20, 1
      %s28 = ssub.s32 %s20, %s27
      %p29 = scmp.eq.s32.totalorder %s28, 0
      %s31 = sadd.s32 %s30, 1
      %s32 = scalar_select %p29, %s30, %s31
      %p35 = pneg %p29
      %p36 = scmp.eq.s32.totalorder %s20, 1
      %p37 = por %p35, %p36
      %p38 = scmp.ne.s32.totalorder %s30, %s33
      %p39 = scmp.eq.s32.totalorder %s20, 0
      %p40 = por %p38, %p39
      %p41 = scmp.ne.s32.totalorder %s30, %s33
      %p42 = scmp.eq.s32.totalorder %s25, 1
      %p43 = por %p41, %p42
      %p44 = scmp.ne.s32.totalorder %s33, %s34
      %p45 = scmp.eq.s32.totalorder %s25, 0
      %p46 = por %p44, %p45
      %p47 = scmp.ne.s32.totalorder %s33, %s34
      %p48 = scmp.eq.s32.totalorder %s26, 1
      %p49 = por %p47, %p48
      %p51 = scmp.ne.s32.totalorder %s34, %s50
      %p52 = scmp.eq.s32.totalorder %s26, 0
      %p53 = por %p51, %p52
      %s54 = ssub.s32 %s20, %s27
      %p55 = scmp.eq.s32.totalorder %s54, 0
      %s57 = sadd.s32 %s56, 1
      %s58 = scalar_select %p55, %s56, %s57
      %p61 = pneg %p55
      %p62 = scmp.eq.s32.totalorder %s20, 1
      %p63 = por %p61, %p62
      %p64 = scmp.ne.s32.totalorder %s56, %s59
      %p65 = scmp.eq.s32.totalorder %s20, 0
      %p66 = por %p64, %p65
      %p67 = scmp.ne.s32.totalorder %s56, %s59
      %p68 = scmp.eq.s32.totalorder %s25, 1
      %p69 = por %p67, %p68
      %p70 = scmp.ne.s32.totalorder %s59, %s60
      %p71 = scmp.eq.s32.totalorder %s25, 0
      %p72 = por %p70, %p71
      %p73 = scmp.ne.s32.totalorder %s59, %s60
      %p74 = scmp.eq.s32.totalorder %s26, 1
      %p75 = por %p73, %p74
      %p77 = scmp.ne.s32.totalorder %s60, %s76
      %p78 = scmp.eq.s32.totalorder %s26, 0
      %p79 = por %p77, %p78
      %s80 = ssub.s32 %s20, %s27
      %p81 = scmp.eq.s32.totalorder %s80, 0
      %s83 = sadd.s32 %s82, 1
      %s84 = scalar_select %p81, %s82, %s83
      %p87 = pneg %p81
      %p88 = scmp.eq.s32.totalorder %s20, 1
      %p89 = por %p87, %p88
      %p90 = scmp.ne.s32.totalorder %s82, %s85
      %p91 = scmp.eq.s32.totalorder %s20, 0
      %p92 = por %p90, %p91
      %p93 = scmp.ne.s32.totalorder %s82, %s85
      %p94 = scmp.eq.s32.totalorder %s25, 1
      %p95 = por %p93, %p94
      %p96 = scmp.ne.s32.totalorder %s85, %s86
      %p97 = scmp.eq.s32.totalorder %s25, 0
      %p98 = por %p96, %p97
      %p99 = scmp.ne.s32.totalorder %s85, %s86
      %p100 = scmp.eq.s32.totalorder %s26, 1
      %p101 = por %p99, %p100
      %p103 = scmp.ne.s32.totalorder %s86, %s102
      %p104 = scmp.eq.s32.totalorder %s26, 0
      %p105 = por %p103, %p104
      %s106 = ssub.s32 %s20, %s27
      %p107 = scmp.eq.s32.totalorder %s106, 0
      %s109 = sadd.s32 %s108, 1
      %s110 = scalar_select %p107, %s108, %s109
      %p113 = pneg %p107
      %p114 = scmp.eq.s32.totalorder %s20, 1
      %p115 = por %p113, %p114
      %p116 = scmp.ne.s32.totalorder %s108, %s111
      %p117 = scmp.eq.s32.totalorder %s20, 0
      %p118 = por %p116, %p117
      %p119 = scmp.ne.s32.totalorder %s108, %s111
      %p120 = scmp.eq.s32.totalorder %s25, 1
      %p121 = por %p119, %p120
      %p122 = scmp.ne.s32.totalorder %s111, %s112
      %p123 = scmp.eq.s32.totalorder %s25, 0
      %p124 = por %p122, %p123
      %p125 = scmp.ne.s32.totalorder %s111, %s112
      %p126 = scmp.eq.s32.totalorder %s26, 1
      %p127 = por %p125, %p126
      %p129 = scmp.ne.s32.totalorder %s112, %s128
      %p130 = scmp.eq.s32.totalorder %s26, 0
      %p131 = por %p129, %p130
      %s133 = sadd.s32 %s132, 1
      %p136 = scmp.eq.s32.totalorder %s20, 1
      %p137 = scmp.ne.s32.totalorder %s132, %s134
      %p138 = scmp.eq.s32.totalorder %s20, 0
      %p139 = por %p137, %p138
      %p140 = scmp.ne.s32.totalorder %s132, %s134
      %p141 = scmp.eq.s32.totalorder %s25, 1
      %p142 = por %p140, %p141
      %p143 = scmp.ne.s32.totalorder %s134, %s135
      %p144 = scmp.eq.s32.totalorder %s25, 0
      %p145 = por %p143, %p144
      %p146 = scmp.ne.s32.totalorder %s134, %s135
      %p147 = scmp.eq.s32.totalorder %s26, 1
      %p148 = por %p146, %p147
      %p150 = scmp.ne.s32.totalorder %s135, %s149
      %p151 = scmp.eq.s32.totalorder %s26, 0
      %p152 = por %p150, %p151
      %s154 = sadd.s32 %s153, 1
      %p157 = scmp.eq.s32.totalorder %s20, 1
      %p158 = scmp.ne.s32.totalorder %s153, %s155
      %p159 = scmp.eq.s32.totalorder %s20, 0
      %p160 = por %p158, %p159
      %p161 = scmp.ne.s32.totalorder %s153, %s155
      %p162 = scmp.eq.s32.totalorder %s25, 1
      %p163 = por %p161, %p162
      %p164 = scmp.ne.s32.totalorder %s155, %s156
      %p165 = scmp.eq.s32.totalorder %s25, 0
      %p166 = por %p164, %p165
      %p167 = scmp.ne.s32.totalorder %s155, %s156
      %p168 = scmp.eq.s32.totalorder %s26, 1
      %p169 = por %p167, %p168
      %p171 = scmp.ne.s32.totalorder %s156, %s170
      %p172 = scmp.eq.s32.totalorder %s26, 0
      %p173 = por %p171, %p172
      %s175 = sadd.s32 %s174, 1
      %p178 = scmp.eq.s32.totalorder %s20, 1
      %p179 = scmp.ne.s32.totalorder %s174, %s176
      %p180 = scmp.eq.s32.totalorder %s20, 0
      %p181 = por %p179, %p180
      %p182 = scmp.ne.s32.totalorder %s174, %s176
      %p183 = scmp.eq.s32.totalorder %s25, 1
      %p184 = por %p182, %p183
      %p185 = scmp.ne.s32.totalorder %s176, %s177
      %p186 = scmp.eq.s32.totalorder %s25, 0
      %p187 = por %p185, %p186
      %p188 = scmp.ne.s32.totalorder %s176, %s177
      %p189 = scmp.eq.s32.totalorder %s26, 1
      %p190 = por %p188, %p189
      %p192 = scmp.ne.s32.totalorder %s177, %s191
      %p193 = scmp.eq.s32.totalorder %s26, 0
      %p194 = por %p192, %p193
      %s196 = sadd.s32 %s195, 1
      %p199 = scmp.eq.s32.totalorder %s20, 1
      %p200 = scmp.ne.s32.totalorder %s195, %s197
      %p201 = scmp.eq.s32.totalorder %s20, 0
      %p202 = por %p200, %p201
      %p203 = scmp.ne.s32.totalorder %s195, %s197
      %p204 = scmp.eq.s32.totalorder %s25, 1
      %p205 = por %p203, %p204
      %p206 = scmp.ne.s32.totalorder %s197, %s198
      %p207 = scmp.eq.s32.totalorder %s25, 0
      %p208 = por %p206, %p207
      %p209 = scmp.ne.s32.totalorder %s197, %s198
      %p210 = scmp.eq.s32.totalorder %s26, 1
      %p211 = por %p209, %p210
      %p213 = scmp.ne.s32.totalorder %s198, %s212
      %p214 = scmp.eq.s32.totalorder %s26, 0
      %p215 = por %p213, %p214
      %s217 = sadd.s32 %s216, 1
      %p220 = scmp.eq.s32.totalorder %s20, 1
      %p221 = scmp.ne.s32.totalorder %s216, %s218
      %p222 = scmp.eq.s32.totalorder %s20, 0
      %p223 = por %p221, %p222
      %p224 = scmp.ne.s32.totalorder %s216, %s218
      %p225 = scmp.eq.s32.totalorder %s25, 1
      %p226 = por %p224, %p225
      %p227 = scmp.ne.s32.totalorder %s218, %s219
      %p228 = scmp.eq.s32.totalorder %s25, 0
      %p229 = por %p227, %p228
      %p230 = scmp.ne.s32.totalorder %s218, %s219
      %p231 = scmp.eq.s32.totalorder %s26, 1
      %p232 = por %p230, %p231
      %p234 = scmp.ne.s32.totalorder %s219, %s233
      %p235 = scmp.eq.s32.totalorder %s26, 0
      %p236 = por %p234, %p235
      %s238 = sadd.s32 %s237, 1
      %p241 = scmp.eq.s32.totalorder %s20, 1
      %p242 = scmp.ne.s32.totalorder %s237, %s239
      %p243 = scmp.eq.s32.totalorder %s20, 0
      %p244 = por %p242, %p243
      %p245 = scmp.ne.s32.totalorder %s237, %s239
      %p246 = scmp.eq.s32.totalorder %s25, 1
      %p247 = por %p245, %p246
      %p248 = scmp.ne.s32.totalorder %s239, %s240
      %p249 = scmp.eq.s32.totalorder %s25, 0
      %p250 = por %p248, %p249
      %p251 = scmp.ne.s32.totalorder %s239, %s240
      %p252 = scmp.eq.s32.totalorder %s26, 1
      %p253 = por %p251, %p252
      %p255 = scmp.ne.s32.totalorder %s240, %s254
      %p256 = scmp.eq.s32.totalorder %s26, 0
      %p257 = por %p255, %p256
      %s259 = sadd.s32 %s258, 1
      %p262 = scmp.eq.s32.totalorder %s20, 1
      %p263 = scmp.ne.s32.totalorder %s258, %s260
      %p264 = scmp.eq.s32.totalorder %s20, 0
      %p265 = por %p263, %p264
      %p266 = scmp.ne.s32.totalorder %s258, %s260
      %p267 = scmp.eq.s32.totalorder %s25, 1
      %p268 = por %p266, %p267
      %p269 = scmp.ne.s32.totalorder %s260, %s261
      %p270 = scmp.eq.s32.totalorder %s25, 0
      %p271 = por %p269, %p270
      %p272 = scmp.ne.s32.totalorder %s260, %s261
      %p273 = scmp.eq.s32.totalorder %s26, 1
      %p274 = por %p272, %p273
      %p276 = scmp.ne.s32.totalorder %s261, %s275
      %p277 = scmp.eq.s32.totalorder %s26, 0
      %p278 = por %p276, %p277
      %s279 = ssub.s32 %s20, %s27
      %p280 = scmp.eq.s32.totalorder %s279, 0
      %s282 = sadd.s32 %s281, 1
      %s283 = scalar_select %p280, %s281, %s282
      %p286 = pneg %p280
      %p287 = scmp.eq.s32.totalorder %s20, 1
      %p288 = por %p286, %p287
      %p289 = scmp.ne.s32.totalorder %s281, %s284
      %p290 = scmp.eq.s32.totalorder %s20, 0
      %p291 = por %p289, %p290
      %p292 = scmp.ne.s32.totalorder %s281, %s284
      %p293 = scmp.eq.s32.totalorder %s25, 1
      %p294 = por %p292, %p293
      %p295 = scmp.ne.s32.totalorder %s284, %s285
      %p296 = scmp.eq.s32.totalorder %s25, 0
      %p297 = por %p295, %p296
      %p298 = scmp.ne.s32.totalorder %s284, %s285
      %p299 = scmp.eq.s32.totalorder %s26, 1
      %p300 = por %p298, %p299
      %p302 = scmp.ne.s32.totalorder %s285, %s301
      %p303 = scmp.eq.s32.totalorder %s26, 0
      %p304 = por %p302, %p303
      %p305 = scmp.le.s32.totalorder 1, %s20
      %p306 = scmp.lt.s32.totalorder %s20, 3
      %p307 = pnand %p305, %p306
      %p308 = pneg %p307
      // Predicated region
      $region9: #{decoder_transformer_layer.1} parent=5 // pred_check
        _
      $region10: #{decoder_transformer_layer.1} parent=5 // pred_check_branch
        %310 = sbr.rel (%p307) target = $region12
      $region11: #{decoder_transformer_layer.1} parent=5 // pred_region
        %s311 = ssub.s32 %s20, 1
        // Predicated region
        $region13: #{decoder_transformer_layer.1} parent=11 // pred_check
          %p312 = pneg %p145
        $region14: #{decoder_transformer_layer.1} parent=11 // pred_check_branch
          %314 = sbr.rel (%p312) target = $region16
        $region15: #{decoder_transformer_layer.1} parent=11 // pred_region
          _
        $region16: #{decoder_transformer_layer.1} parent=11 // pred_fallthru
          _
        // Predicated region
        $region17: #{decoder_transformer_layer.1} parent=11 // pred_check
          %p315 = pneg %p166
        $region18: #{decoder_transformer_layer.1} parent=11 // pred_check_branch
          %317 = sbr.rel (%p315) target = $region20
        $region19: #{decoder_transformer_layer.1} parent=11 // pred_region
          _
        $region20: #{decoder_transformer_layer.1} parent=11 // pred_fallthru
          _
        // Predicated region
        $region21: #{decoder_transformer_layer.1} parent=11 // pred_check
          %p318 = pneg %p187
        $region22: #{decoder_transformer_layer.1} parent=11 // pred_check_branch
          %320 = sbr.rel (%p318) target = $region24
        $region23: #{decoder_transformer_layer.1} parent=11 // pred_region
          _
        $region24: #{decoder_transformer_layer.1} parent=11 // pred_fallthru
          _
        // Predicated region
        $region25: #{decoder_transformer_layer.1} parent=11 // pred_check
          %p321 = pneg %p208
        $region26: #{decoder_transformer_layer.1} parent=11 // pred_check_branch
          %323 = sbr.rel (%p321) target = $region28
        $region27: #{decoder_transformer_layer.1} parent=11 // pred_region
          _
        $region28: #{decoder_transformer_layer.1} parent=11 // pred_fallthru
          _
        // Predicated region
        $region29: #{decoder_transformer_layer.1} parent=11 // pred_check
          %p324 = pneg %p229
        $region30: #{decoder_transformer_layer.1} parent=11 // pred_check_branch
          %326 = sbr.rel (%p324) target = $region32
        $region31: #{decoder_transformer_layer.1} parent=11 // pred_region
          _
        $region32: #{decoder_transformer_layer.1} parent=11 // pred_fallthru
          _
        // Predicated region
        $region33: #{decoder_transformer_layer.1} parent=11 // pred_check
          %p327 = pneg %p250
        $region34: #{decoder_transformer_layer.1} parent=11 // pred_check_branch
          %329 = sbr.rel (%p327) target = $region36
        $region35: #{decoder_transformer_layer.1} parent=11 // pred_region
          _
        $region36: #{decoder_transformer_layer.1} parent=11 // pred_fallthru
          _
        // Predicated region
        $region37: #{decoder_transformer_layer.1} parent=11 // pred_check
          %p330 = pneg %p271
        $region38: #{decoder_transformer_layer.1} parent=11 // pred_check_branch
          %332 = sbr.rel (%p330) target = $region40
        $region39: #{decoder_transformer_layer.1} parent=11 // pred_region
          _
        $region40: #{decoder_transformer_layer.1} parent=11 // pred_fallthru
          _
      $region12: #{decoder_transformer_layer.1} parent=5 // pred_fallthru
        _
      %p333 = scmp.lt.s32.totalorder %s20, 2
      // Predicated region
      $region41: #{decoder_transformer_layer.1} parent=5 // pred_check
        %p334 = pneg %p333
      $region42: #{decoder_transformer_layer.1} parent=5 // pred_check_branch
        %336 = sbr.rel (%p334) target = $region44
      $region43: #{decoder_transformer_layer.1} parent=5 // pred_region
        // Predicated region
        $region45: #{decoder_transformer_layer.1} parent=43 // pred_check
          %p337 = pneg %p40
        $region46: #{decoder_transformer_layer.1} parent=43 // pred_check_branch
          %339 = sbr.rel (%p337) target = $region48
        $region47: #{decoder_transformer_layer.1} parent=43 // pred_region
          %p340 = scmp.lt.s32.totalorder %s20, 1
          %s341 = scalar_select %p340, %s20, 1
          %s342 = smul.addr %s341, 8
          %s343 = scalar_lea.vmem %s0, %s342
        $region48: #{decoder_transformer_layer.1} parent=43 // pred_fallthru
          _
        // Predicated region
        $region49: #{decoder_transformer_layer.1} parent=43 // pred_check
          %p344 = pneg %p66
        $region50: #{decoder_transformer_layer.1} parent=43 // pred_check_branch
          %346 = sbr.rel (%p344) target = $region52
        $region51: #{decoder_transformer_layer.1} parent=43 // pred_region
          %p347 = scmp.lt.s32.totalorder %s20, 1
          %s348 = scalar_select %p347, %s20, 1
          %s349 = smul.addr %s348, 8
          %s350 = scalar_lea.vmem %s1, %s349
        $region52: #{decoder_transformer_layer.1} parent=43 // pred_fallthru
          _
        // Predicated region
        $region53: #{decoder_transformer_layer.1} parent=43 // pred_check
          %p351 = pneg %p92
        $region54: #{decoder_transformer_layer.1} parent=43 // pred_check_branch
          %353 = sbr.rel (%p351) target = $region56
        $region55: #{decoder_transformer_layer.1} parent=43 // pred_region
          %p354 = scmp.lt.s32.totalorder %s20, 1
          %s355 = scalar_select %p354, %s20, 1
          %s356 = scalar_lea.vmem %s2, %s355
        $region56: #{decoder_transformer_layer.1} parent=43 // pred_fallthru
          _
        // Predicated region
        $region57: #{decoder_transformer_layer.1} parent=43 // pred_check
          %p357 = pneg %p118
        $region58: #{decoder_transformer_layer.1} parent=43 // pred_check_branch
          %359 = sbr.rel (%p357) target = $region60
        $region59: #{decoder_transformer_layer.1} parent=43 // pred_region
          %p360 = scmp.lt.s32.totalorder %s20, 1
          %s361 = scalar_select %p360, %s20, 1
          %s362 = scalar_lea.vmem %s3, %s361
        $region60: #{decoder_transformer_layer.1} parent=43 // pred_fallthru
          _
      $region44: #{decoder_transformer_layer.1} parent=5 // pred_fallthru
        _
      %p363 = scmp.le.s32.totalorder 1, %s20
      %p364 = scmp.lt.s32.totalorder %s20, 3
      %p365 = pnand %p363, %p364
      %p366 = pneg %p365
      // Predicated region
      $region61: #{decoder_transformer_layer.1} parent=5 // pred_check
        _
      $region62: #{decoder_transformer_layer.1} parent=5 // pred_check_branch
        %368 = sbr.rel (%p365) target = $region64
      $region63: #{decoder_transformer_layer.1} parent=5 // pred_region
        %s369 = ssub.s32 %s20, 1
        %p370 = scmp.lt.s32.totalorder %s25, 1
        %s371 = scalar_select %p370, %s25, 1
        %s372 = smul.addr %s371, 8
        %s373 = scalar_lea.vmem %s0, %s372
        %p374 = pneg %p46
        %p375 = pneg %p43
        %p376 = scmp.lt.s32.totalorder %s25, 1
        %s377 = scalar_select %p376, %s25, 1
        %s378 = smul.addr %s377, 8
        %s379 = scalar_lea.vmem %s1, %s378
        %p380 = pneg %p72
        %p381 = pneg %p69
        %p382 = scmp.lt.s32.totalorder %s25, 1
        %s383 = scalar_select %p382, %s25, 1
        %s384 = scalar_lea.vmem %s2, %s383
        %p385 = pneg %p98
        %p386 = pneg %p95
        %p387 = scmp.lt.s32.totalorder %s25, 1
        %s388 = scalar_select %p387, %s25, 1
        %s389 = scalar_lea.vmem %s3, %s388
        %p390 = pneg %p124
        %p391 = pneg %p121
        %p392 = pneg %p145
        %p393 = pneg %p142
        %p394 = pneg %p166
        %p395 = pneg %p163
        %p396 = pneg %p187
        %p397 = pneg %p184
        %p398 = pneg %p208
        %p399 = pneg %p205
        %p400 = pneg %p229
        %p401 = pneg %p226
        %p402 = pneg %p250
        %p403 = pneg %p247
        %p404 = pneg %p271
        %p405 = pneg %p268
        %p406 = pneg %p297
        %p407 = pneg %p294
        %s408 = sand.u32 %s284, 1
        %s409 = scalar_lea.sflag [#allocation3], %s408
        %s410 = sand.u32 %s284, 1
        %s411 = smul.addr %s410, 8
        %s412 = scalar_lea.vmem [#allocation2], %s411
        %p413 = scmp.lt.s32.totalorder %s25, 1
        %s414 = scalar_select %p413, %s25, 1
        %s415 = smul.addr %s414, 8
        %s416 = scalar_lea.vmem %s0, %s415
        %p417 = scmp.lt.s32.totalorder %s25, 1
        %s418 = scalar_select %p417, %s25, 1
        %s419 = smul.addr %s418, 8
        %s420 = scalar_lea.vmem %s1, %s419
        %p421 = scmp.lt.s32.totalorder %s25, 1
        %s422 = scalar_select %p421, %s25, 1
        %s423 = scalar_lea.vmem %s2, %s422
        %p424 = scmp.lt.s32.totalorder %s25, 1
        %s425 = scalar_select %p424, %s25, 1
        %s426 = scalar_lea.vmem %s3, %s425
        %v428 = vld [vmem:[%s416] sm:$0xff]
        %v429 = vld [vmem:[%s420] sm:$0xff]
        %v430 = vld [vmem:[%s423] sm:$0x1]
        %vm431 = vcmp.gt.f32.partialorder %v430, 0.5
        %v432 = vld [vmem:[%s426] sm:$0x1]
        %vm433 = vcmp.gt.f32.partialorder %v432, 0.5
        %v434 = vlaneseq
        %v435 = vshrl.u32 %v434, 7
        %v436 = vlaneseq
        %v437 = vand.u32 %v436, 127
        %vm438 = vcmp.le.s32.totalorder %v437, %v435
        %v439 = vsel %vm431, 1, 0
        %v440 = vlaneseq
        %v441 = vshrl.u32 %v440, 7
        %v442 = vsub.s32 0, %v441
        %v443 = vrot.slane %v439, %v442
        %vm444 = vcmp.eq.s32.totalorder %v443, 1
        %vm445 = vmand %vm438, %vm444
        %v446 = vld [vmem:[%s4] sm:$0xf]
        %v447 = vld [vmem:[%s4 + $0x4] sm:$0xf]
        %v448 = vld [vmem:[%s4 + $0x8] sm:$0xf]
        %v449 = vld [vmem:[%s4 + $0xc] sm:$0xf]
        %v450 = vpack.c.bf16 %v428, %v428
        %v451 = vld [vmem:[%s5] sm:$0x1]
        %v453 = vlaneseq
        %v454 = vshrl.u32 %v453, 7
        %v455 = vsub.s32 0, %v454
        %v456 = vrot.slane %v451, %v455
        %v462 = vunpack.c.l.b16 %v446
        %v463 = vunpack.c.l.b16 %v447
        %v464 = vunpack.c.l.b16 %v448
        %v465 = vunpack.c.l.b16 %v449
        %v466 = vpack.c.b16 %v463, %v462
        %v467 = vpack.c.b16 %v465, %v464
        %vm470 = vcmask 261120
        %v472 = vsel %vm470, %v450, 0
        %474 = vmatprep.subr.bf16.mxu0 0
        %475 = vmatpush1.bf16.msra.mxu0 0
        %476 = vmatprep.subr.bf16.mxu0 0
        %477 = vmatpush1.bf16.msra.mxu0 0
        %478 = vmatprep.subr.bf16.mxu0 0
        %479 = vmatpush1.bf16.msra.mxu0 0
        %480 = vmatprep.subr.bf16.mxu0 0
        %481 = vmatpush1.bf16.msra.mxu0 0
        %482 = vmatprep.subr.bf16.mxu0 0
        %483 = vmatpush1.bf16.msra.mxu0 0
        %484 = vmatprep.subr.bf16.mxu0 0
        %485 = vmatpush1.bf16.msra.mxu0 0
        %486 = vmatprep.subr.bf16.mxu0 0
        %487 = vmatpush1.bf16.msra.mxu0 %v467
        %488 = vmatprep.subr.bf16.mxu0 0
        %489 = vmatpush1.bf16.msra.mxu0 %v466
        %490 = vmatprep.subr.bf16.mxu0 0
        %491 = vmatpush2.bf16.msra.mxu0 0
        %492 = vmatprep.subr.bf16.mxu0 0
        %493 = vmatpush2.bf16.msra.mxu0 0
        %494 = vmatprep.subr.bf16.mxu0 0
        %495 = vmatpush2.bf16.msra.mxu0 0
        %496 = vmatprep.subr.bf16.mxu0 0
        %497 = vmatpush2.bf16.msra.mxu0 0
        %498 = vmatprep.subr.bf16.mxu0 0
        %499 = vmatpush2.bf16.msra.mxu0 0
        %500 = vmatprep.subr.bf16.mxu0 0
        %501 = vmatpush2.bf16.msra.mxu0 0
        %502 = vmatprep.subr.bf16.mxu0 0
        %503 = vmatpush2.bf16.msra.mxu0 0
        %504 = vmatprep.subr.bf16.mxu0 0
        %505 = vmatpush2.bf16.msra.mxu0 0
        %506 = vmatprep.mubr.bf16.mxu0 0
        %507 = vmatmul.mubr.bf16.gmra.mxu0 %v472
        %v508 = vpop.f32.mrf.mxu0
        %v509 = vadd.f32 %v456, %v508
        %v510 = vpop.f32.mrf.mxu0
        %v511 = vpop.f32.mrf.mxu0
        %v512 = vpop.f32.mrf.mxu0
        %513 = vdwg.mxu0
        %s514 = scalar_lea.vmem %s4, 16
        %v515 = vld [vmem:[%s514] sm:$0xf]
        %v516 = vld [vmem:[%s514 + $0x4] sm:$0xf]
        %v517 = vld [vmem:[%s514 + $0x8] sm:$0xf]
        %v518 = vld [vmem:[%s514 + $0xc] sm:$0xf]
        %s519 = scalar_lea.vmem %s5, 1
        %v520 = vld [vmem:[%s519] sm:$0x1]
        %v522 = vlaneseq
        %v523 = vshrl.u32 %v522, 7
        %v524 = vsub.s32 0, %v523
        %v525 = vrot.slane %v520, %v524
        %v531 = vunpack.c.l.b16 %v515
        %v532 = vunpack.c.l.b16 %v516
        %v533 = vunpack.c.l.b16 %v517
        %v534 = vunpack.c.l.b16 %v518
        %v535 = vpack.c.b16 %v532, %v531
        %v536 = vpack.c.b16 %v534, %v533
        %539 = vmatprep.subr.bf16.mxu0 0
        %540 = vmatpush1.bf16.msra.mxu0 0
        %541 = vmatprep.subr.bf16.mxu0 0
        %542 = vmatpush1.bf16.msra.mxu0 0
        %543 = vmatprep.subr.bf16.mxu0 0
        %544 = vmatpush1.bf16.msra.mxu0 0
        %545 = vmatprep.subr.bf16.mxu0 0
        %546 = vmatpush1.bf16.msra.mxu0 0
        %547 = vmatprep.subr.bf16.mxu0 0
        %548 = vmatpush1.bf16.msra.mxu0 0
        %549 = vmatprep.subr.bf16.mxu0 0
        %550 = vmatpush1.bf16.msra.mxu0 0
        %551 = vmatprep.subr.bf16.mxu0 0
        %552 = vmatpush1.bf16.msra.mxu0 %v536
        %553 = vmatprep.subr.bf16.mxu0 0
        %554 = vmatpush1.bf16.msra.mxu0 %v535
        %555 = vmatprep.subr.bf16.mxu0 0
        %556 = vmatpush2.bf16.msra.mxu0 0
        %557 = vmatprep.subr.bf16.mxu0 0
        %558 = vmatpush2.bf16.msra.mxu0 0
        %559 = vmatprep.subr.bf16.mxu0 0
        %560 = vmatpush2.bf16.msra.mxu0 0
        %561 = vmatprep.subr.bf16.mxu0 0
        %562 = vmatpush2.bf16.msra.mxu0 0
        %563 = vmatprep.subr.bf16.mxu0 0
        %564 = vmatpush2.bf16.msra.mxu0 0
        %565 = vmatprep.subr.bf16.mxu0 0
        %566 = vmatpush2.bf16.msra.mxu0 0
        %567 = vmatprep.subr.bf16.mxu0 0
        %568 = vmatpush2.bf16.msra.mxu0 0
        %569 = vmatprep.subr.bf16.mxu0 0
        %570 = vmatpush2.bf16.msra.mxu0 0
        %571 = vmatprep.mubr.bf16.mxu0 0
        %572 = vmatmul.mubr.bf16.gmra.mxu0 %v472
        %v573 = vpop.f32.mrf.mxu0
        %v574 = vadd.f32 %v525, %v573
        %v575 = vpop.f32.mrf.mxu0
        %v576 = vpop.f32.mrf.mxu0
        %v577 = vpop.f32.mrf.mxu0
        %578 = vdwg.mxu0
        %s579 = scalar_lea.vmem %s4, 32
        %v580 = vld [vmem:[%s579] sm:$0xf]
        %v581 = vld [vmem:[%s579 + $0x4] sm:$0xf]
        %v582 = vld [vmem:[%s579 + $0x8] sm:$0xf]
        %v583 = vld [vmem:[%s579 + $0xc] sm:$0xf]
        %s584 = scalar_lea.vmem %s5, 2
        %v585 = vld [vmem:[%s584] sm:$0x1]
        %v587 = vlaneseq
        %v588 = vshrl.u32 %v587, 7
        %v589 = vsub.s32 0, %v588
        %v590 = vrot.slane %v585, %v589
        %v596 = vunpack.c.l.b16 %v580
        %v597 = vunpack.c.l.b16 %v581
        %v598 = vunpack.c.l.b16 %v582
        %v599 = vunpack.c.l.b16 %v583
        %v600 = vpack.c.b16 %v597, %v596
        %v601 = vpack.c.b16 %v599, %v598
        %604 = vmatprep.subr.bf16.mxu0 0
        %605 = vmatpush1.bf16.msra.mxu0 0
        %606 = vmatprep.subr.bf16.mxu0 0
        %607 = vmatpush1.bf16.msra.mxu0 0
        %608 = vmatprep.subr.bf16.mxu0 0
        %609 = vmatpush1.bf16.msra.mxu0 0
        %610 = vmatprep.subr.bf16.mxu0 0
        %611 = vmatpush1.bf16.msra.mxu0 0
        %612 = vmatprep.subr.bf16.mxu0 0
        %613 = vmatpush1.bf16.msra.mxu0 0
        %614 = vmatprep.subr.bf16.mxu0 0
        %615 = vmatpush1.bf16.msra.mxu0 0
        %616 = vmatprep.subr.bf16.mxu0 0
        %617 = vmatpush1.bf16.msra.mxu0 %v601
        %618 = vmatprep.subr.bf16.mxu0 0
        %619 = vmatpush1.bf16.msra.mxu0 %v600
        %620 = vmatprep.subr.bf16.mxu0 0
        %621 = vmatpush2.bf16.msra.mxu0 0
        %622 = vmatprep.subr.bf16.mxu0 0
        %623 = vmatpush2.bf16.msra.mxu0 0
        %624 = vmatprep.subr.bf16.mxu0 0
        %625 = vmatpush2.bf16.msra.mxu0 0
        %626 = vmatprep.subr.bf16.mxu0 0
        %627 = vmatpush2.bf16.msra.mxu0 0
        %628 = vmatprep.subr.bf16.mxu0 0
        %629 = vmatpush2.bf16.msra.mxu0 0
        %630 = vmatprep.subr.bf16.mxu0 0
        %631 = vmatpush2.bf16.msra.mxu0 0
        %632 = vmatprep.subr.bf16.mxu0 0
        %633 = vmatpush2.bf16.msra.mxu0 0
        %634 = vmatprep.subr.bf16.mxu0 0
        %635 = vmatpush2.bf16.msra.mxu0 0
        %636 = vmatprep.mubr.bf16.mxu0 0
        %637 = vmatmul.mubr.bf16.gmra.mxu0 %v472
        %v638 = vpop.f32.mrf.mxu0
        %v639 = vadd.f32 %v590, %v638
        %v640 = vpop.f32.mrf.mxu0
        %v641 = vpop.f32.mrf.mxu0
        %v642 = vpop.f32.mrf.mxu0
        %643 = vdwg.mxu0
        %v644 = vpack.c.bf16 %v509, %v509
        %v645 = vpack.c.bf16 %v574, %v574
        %v647 = vsel %vm470, %v644, 0
        %v650 = vsel %vm470, %v645, 0
        %652 = vmatprep.subr.bf16.mxu0 0
        %653 = vmatpush1.bf16.xpose.msra.mxu0 0
        %654 = vmatprep.subr.bf16.mxu0 0
        %655 = vmatpush1.bf16.xpose.msra.mxu0 0
        %656 = vmatprep.subr.bf16.mxu0 0
        %657 = vmatpush1.bf16.xpose.msra.mxu0 0
        %658 = vmatprep.subr.bf16.mxu0 0
        %659 = vmatpush1.bf16.xpose.msra.mxu0 0
        %660 = vmatprep.subr.bf16.mxu0 0
        %661 = vmatpush1.bf16.xpose.msra.mxu0 0
        %662 = vmatprep.subr.bf16.mxu0 0
        %663 = vmatpush1.bf16.xpose.msra.mxu0 0
        %664 = vmatprep.subr.bf16.mxu0 0
        %665 = vmatpush1.bf16.xpose.msra.mxu0 0
        %666 = vmatprep.subr.bf16.mxu0 0
        %667 = vmatpush1.bf16.xpose.msra.mxu0 %v650
        %668 = vmatprep.subr.bf16.mxu0 0
        %669 = vmatpush2.bf16.xpose.msra.mxu0 0
        %670 = vmatprep.subr.bf16.mxu0 0
        %671 = vmatpush2.bf16.xpose.msra.mxu0 0
        %672 = vmatprep.subr.bf16.mxu0 0
        %673 = vmatpush2.bf16.xpose.msra.mxu0 0
        %674 = vmatprep.subr.bf16.mxu0 0
        %675 = vmatpush2.bf16.xpose.msra.mxu0 0
        %676 = vmatprep.subr.bf16.mxu0 0
        %677 = vmatpush2.bf16.xpose.msra.mxu0 0
        %678 = vmatprep.subr.bf16.mxu0 0
        %679 = vmatpush2.bf16.xpose.msra.mxu0 0
        %680 = vmatprep.subr.bf16.mxu0 0
        %681 = vmatpush2.bf16.xpose.msra.mxu0 0
        %682 = vmatprep.subr.bf16.mxu0 0
        %683 = vmatpush2.bf16.xpose.msra.mxu0 0
        %684 = vmatprep.mubr.bf16.mxu0 0
        %685 = vmatmul.mubr.bf16.gmra.mxu0 %v647
        %v686 = vpop.f32.mrf.mxu0
        %v687 = vadd.f32 0.0, %v686
        %v688 = vpop.f32.mrf.mxu0
        %v689 = vpop.f32.mrf.mxu0
        %v690 = vpop.f32.mrf.mxu0
        %691 = vdwg.mxu0
        %v692 = vmul.f32 %v687, 0.17677669
        %v693 = vsel %vm445, %v692, -1e+09
        %vm694 = vcmask 64512
        %v695 = vsel %vm694, %v693, -inf
        %696 = vmax.xlane.f32.xlu0 %v695
        %v697 = vpop.xlane.xlu0 %696
        %v698 = vsub.f32 %v693, %v697
        %v699 = vmul.f32 %v698, 1.442695
        %v700 = vpow.pop %v699
        %v701 = vsel %vm694, %v700, 0.0
        %702 = vadd.xlane.f32.xlu0 %v701
        %v703 = vpop.xlane.xlu0 %702
        %v704 = vrcp.pop %v703
        %v705 = vmul.f32 %v700, %v704
        %v706 = vpack.c.bf16 %v705, %v705
        %v707 = vpack.c.bf16 %v639, %v639
        %v709 = vsel %vm694, %v706, 0
        %vm711 = vcmask 1043456
        %v713 = vsel %vm711, %v707, 0
        %715 = vmatprep.subr.bf16.mxu0 0
        %716 = vmatpush1.bf16.msra.mxu0 0
        %717 = vmatprep.subr.bf16.mxu0 0
        %718 = vmatpush1.bf16.msra.mxu0 0
        %719 = vmatprep.subr.bf16.mxu0 0
        %720 = vmatpush1.bf16.msra.mxu0 0
        %721 = vmatprep.subr.bf16.mxu0 0
        %722 = vmatpush1.bf16.msra.mxu0 0
        %723 = vmatprep.subr.bf16.mxu0 0
        %724 = vmatpush1.bf16.msra.mxu0 0
        %725 = vmatprep.subr.bf16.mxu0 0
        %726 = vmatpush1.bf16.msra.mxu0 0
        %727 = vmatprep.subr.bf16.mxu0 0
        %728 = vmatpush1.bf16.msra.mxu0 0
        %729 = vmatprep.subr.bf16.mxu0 0
        %730 = vmatpush1.bf16.msra.mxu0 %v713
        %731 = vmatprep.subr.bf16.mxu0 0
        %732 = vmatpush2.bf16.msra.mxu0 0
        %733 = vmatprep.subr.bf16.mxu0 0
        %734 = vmatpush2.bf16.msra.mxu0 0
        %735 = vmatprep.subr.bf16.mxu0 0
        %736 = vmatpush2.bf16.msra.mxu0 0
        %737 = vmatprep.subr.bf16.mxu0 0
        %738 = vmatpush2.bf16.msra.mxu0 0
        %739 = vmatprep.subr.bf16.mxu0 0
        %740 = vmatpush2.bf16.msra.mxu0 0
        %741 = vmatprep.subr.bf16.mxu0 0
        %742 = vmatpush2.bf16.msra.mxu0 0
        %743 = vmatprep.subr.bf16.mxu0 0
        %744 = vmatpush2.bf16.msra.mxu0 0
        %745 = vmatprep.subr.bf16.mxu0 0
        %746 = vmatpush2.bf16.msra.mxu0 0
        %747 = vmatprep.mubr.bf16.mxu0 0
        %748 = vmatmul.mubr.bf16.gmra.mxu0 %v709
        %v749 = vpop.f32.mrf.mxu0
        %v750 = vadd.f32 0.0, %v749
        %v751 = vpop.f32.mrf.mxu0
        %v752 = vpop.f32.mrf.mxu0
        %v753 = vpop.f32.mrf.mxu0
        %754 = vdwg.mxu0
        %v755 = vld [vmem:[%s8] sm:$0xf]
        %v756 = vld [vmem:[%s8 + $0x4] sm:$0xf]
        %v757 = vld [vmem:[%s8 + $0x8] sm:$0xf]
        %v758 = vld [vmem:[%s8 + $0xc] sm:$0xf]
        %v759 = vpack.c.bf16 %v750, %v750
        %v760 = vld [vmem:[%s9] sm:$0x1]
        %v762 = vlaneseq
        %v763 = vshrl.u32 %v762, 7
        %v764 = vsub.s32 0, %v763
        %v765 = vrot.slane %v760, %v764
        %v771 = vunpack.c.l.b16 %v755
        %v772 = vunpack.c.l.b16 %v756
        %v773 = vunpack.c.l.b16 %v757
        %v774 = vunpack.c.l.b16 %v758
        %v775 = vpack.c.b16 %v772, %v771
        %v776 = vpack.c.b16 %v774, %v773
        %v780 = vsel %vm470, %v759, 0
        %782 = vmatprep.subr.bf16.mxu0 0
        %783 = vmatpush1.bf16.msra.mxu0 0
        %784 = vmatprep.subr.bf16.mxu0 0
        %785 = vmatpush1.bf16.msra.mxu0 0
        %786 = vmatprep.subr.bf16.mxu0 0
        %787 = vmatpush1.bf16.msra.mxu0 0
        %788 = vmatprep.subr.bf16.mxu0 0
        %789 = vmatpush1.bf16.msra.mxu0 0
        %790 = vmatprep.subr.bf16.mxu0 0
        %791 = vmatpush1.bf16.msra.mxu0 0
        %792 = vmatprep.subr.bf16.mxu0 0
        %793 = vmatpush1.bf16.msra.mxu0 0
        %794 = vmatprep.subr.bf16.mxu0 0
        %795 = vmatpush1.bf16.msra.mxu0 %v776
        %796 = vmatprep.subr.bf16.mxu0 0
        %797 = vmatpush1.bf16.msra.mxu0 %v775
        %798 = vmatprep.subr.bf16.mxu0 0
        %799 = vmatpush2.bf16.msra.mxu0 0
        %800 = vmatprep.subr.bf16.mxu0 0
        %801 = vmatpush2.bf16.msra.mxu0 0
        %802 = vmatprep.subr.bf16.mxu0 0
        %803 = vmatpush2.bf16.msra.mxu0 0
        %804 = vmatprep.subr.bf16.mxu0 0
        %805 = vmatpush2.bf16.msra.mxu0 0
        %806 = vmatprep.subr.bf16.mxu0 0
        %807 = vmatpush2.bf16.msra.mxu0 0
        %808 = vmatprep.subr.bf16.mxu0 0
        %809 = vmatpush2.bf16.msra.mxu0 0
        %810 = vmatprep.subr.bf16.mxu0 0
        %811 = vmatpush2.bf16.msra.mxu0 0
        %812 = vmatprep.subr.bf16.mxu0 0
        %813 = vmatpush2.bf16.msra.mxu0 0
        %814 = vmatprep.mubr.bf16.mxu0 0
        %815 = vmatmul.mubr.bf16.gmra.mxu0 %v780
        %v816 = vpop.f32.mrf.mxu0
        %v817 = vadd.f32 %v765, %v816
        %v818 = vpop.f32.mrf.mxu0
        %v819 = vpop.f32.mrf.mxu0
        %v820 = vpop.f32.mrf.mxu0
        %821 = vdwg.mxu0
        %v822 = vadd.f32 %v817, %v428
        %v823 = vld [vmem:[%s6] sm:$0xf]
        %v824 = vld [vmem:[%s6 + $0x4] sm:$0xf]
        %v825 = vld [vmem:[%s6 + $0x8] sm:$0xf]
        %v826 = vld [vmem:[%s6 + $0xc] sm:$0xf]
        %v827 = vpack.c.bf16 %v822, %v822
        %v828 = vld [vmem:[%s7] sm:$0x1]
        %v830 = vlaneseq
        %v831 = vshrl.u32 %v830, 7
        %v832 = vsub.s32 0, %v831
        %v833 = vrot.slane %v828, %v832
        %v839 = vunpack.c.l.b16 %v823
        %v840 = vunpack.c.l.b16 %v824
        %v841 = vunpack.c.l.b16 %v825
        %v842 = vunpack.c.l.b16 %v826
        %v843 = vpack.c.b16 %v840, %v839
        %v844 = vpack.c.b16 %v842, %v841
        %v848 = vsel %vm470, %v827, 0
        %850 = vmatprep.subr.bf16.mxu0 0
        %851 = vmatpush1.bf16.msra.mxu0 0
        %852 = vmatprep.subr.bf16.mxu0 0
        %853 = vmatpush1.bf16.msra.mxu0 0
        %854 = vmatprep.subr.bf16.mxu0 0
        %855 = vmatpush1.bf16.msra.mxu0 0
        %856 = vmatprep.subr.bf16.mxu0 0
        %857 = vmatpush1.bf16.msra.mxu0 0
        %858 = vmatprep.subr.bf16.mxu0 0
        %859 = vmatpush1.bf16.msra.mxu0 0
        %860 = vmatprep.subr.bf16.mxu0 0
        %861 = vmatpush1.bf16.msra.mxu0 0
        %862 = vmatprep.subr.bf16.mxu0 0
        %863 = vmatpush1.bf16.msra.mxu0 %v844
        %864 = vmatprep.subr.bf16.mxu0 0
        %865 = vmatpush1.bf16.msra.mxu0 %v843
        %866 = vmatprep.subr.bf16.mxu0 0
        %867 = vmatpush2.bf16.msra.mxu0 0
        %868 = vmatprep.subr.bf16.mxu0 0
        %869 = vmatpush2.bf16.msra.mxu0 0
        %870 = vmatprep.subr.bf16.mxu0 0
        %871 = vmatpush2.bf16.msra.mxu0 0
        %872 = vmatprep.subr.bf16.mxu0 0
        %873 = vmatpush2.bf16.msra.mxu0 0
        %874 = vmatprep.subr.bf16.mxu0 0
        %875 = vmatpush2.bf16.msra.mxu0 0
        %876 = vmatprep.subr.bf16.mxu0 0
        %877 = vmatpush2.bf16.msra.mxu0 0
        %878 = vmatprep.subr.bf16.mxu0 0
        %879 = vmatpush2.bf16.msra.mxu0 0
        %880 = vmatprep.subr.bf16.mxu0 0
        %881 = vmatpush2.bf16.msra.mxu0 0
        %882 = vmatprep.mubr.bf16.mxu0 0
        %883 = vmatmul.mubr.bf16.gmra.mxu0 %v848
        %v884 = vpop.f32.mrf.mxu0
        %v885 = vadd.f32 %v833, %v884
        %v886 = vpop.f32.mrf.mxu0
        %v887 = vpop.f32.mrf.mxu0
        %v888 = vpop.f32.mrf.mxu0
        %889 = vdwg.mxu0
        %s890 = scalar_lea.vmem %s6, 16
        %v891 = vld [vmem:[%s890] sm:$0xf]
        %v892 = vld [vmem:[%s890 + $0x4] sm:$0xf]
        %v893 = vld [vmem:[%s890 + $0x8] sm:$0xf]
        %v894 = vld [vmem:[%s890 + $0xc] sm:$0xf]
        %v895 = vpack.c.bf16 %v429, %v429
        %s896 = scalar_lea.vmem %s7, 1
        %v897 = vld [vmem:[%s896] sm:$0x1]
        %v899 = vlaneseq
        %v900 = vshrl.u32 %v899, 7
        %v901 = vsub.s32 0, %v900
        %v902 = vrot.slane %v897, %v901
        %v908 = vunpack.c.l.b16 %v891
        %v909 = vunpack.c.l.b16 %v892
        %v910 = vunpack.c.l.b16 %v893
        %v911 = vunpack.c.l.b16 %v894
        %v912 = vpack.c.b16 %v909, %v908
        %v913 = vpack.c.b16 %v911, %v910
        %v917 = vsel %vm470, %v895, 0
        %919 = vmatprep.subr.bf16.mxu0 0
        %920 = vmatpush1.bf16.msra.mxu0 0
        %921 = vmatprep.subr.bf16.mxu0 0
        %922 = vmatpush1.bf16.msra.mxu0 0
        %923 = vmatprep.subr.bf16.mxu0 0
        %924 = vmatpush1.bf16.msra.mxu0 0
        %925 = vmatprep.subr.bf16.mxu0 0
        %926 = vmatpush1.bf16.msra.mxu0 0
        %927 = vmatprep.subr.bf16.mxu0 0
        %928 = vmatpush1.bf16.msra.mxu0 0
        %929 = vmatprep.subr.bf16.mxu0 0
        %930 = vmatpush1.bf16.msra.mxu0 0
        %931 = vmatprep.subr.bf16.mxu0 0
        %932 = vmatpush1.bf16.msra.mxu0 %v913
        %933 = vmatprep.subr.bf16.mxu0 0
        %934 = vmatpush1.bf16.msra.mxu0 %v912
        %935 = vmatprep.subr.bf16.mxu0 0
        %936 = vmatpush2.bf16.msra.mxu0 0
        %937 = vmatprep.subr.bf16.mxu0 0
        %938 = vmatpush2.bf16.msra.mxu0 0
        %939 = vmatprep.subr.bf16.mxu0 0
        %940 = vmatpush2.bf16.msra.mxu0 0
        %941 = vmatprep.subr.bf16.mxu0 0
        %942 = vmatpush2.bf16.msra.mxu0 0
        %943 = vmatprep.subr.bf16.mxu0 0
        %944 = vmatpush2.bf16.msra.mxu0 0
        %945 = vmatprep.subr.bf16.mxu0 0
        %946 = vmatpush2.bf16.msra.mxu0 0
        %947 = vmatprep.subr.bf16.mxu0 0
        %948 = vmatpush2.bf16.msra.mxu0 0
        %949 = vmatprep.subr.bf16.mxu0 0
        %950 = vmatpush2.bf16.msra.mxu0 0
        %951 = vmatprep.mubr.bf16.mxu0 0
        %952 = vmatmul.mubr.bf16.gmra.mxu0 %v917
        %v953 = vpop.f32.mrf.mxu0
        %v954 = vadd.f32 %v902, %v953
        %v955 = vpop.f32.mrf.mxu0
        %v956 = vpop.f32.mrf.mxu0
        %v957 = vpop.f32.mrf.mxu0
        %958 = vdwg.mxu0
        %s959 = scalar_lea.vmem %s6, 32
        %v960 = vld [vmem:[%s959] sm:$0xf]
        %v961 = vld [vmem:[%s959 + $0x4] sm:$0xf]
        %v962 = vld [vmem:[%s959 + $0x8] sm:$0xf]
        %v963 = vld [vmem:[%s959 + $0xc] sm:$0xf]
        %s964 = scalar_lea.vmem %s7, 2
        %v965 = vld [vmem:[%s964] sm:$0x1]
        %v967 = vlaneseq
        %v968 = vshrl.u32 %v967, 7
        %v969 = vsub.s32 0, %v968
        %v970 = vrot.slane %v965, %v969
        %v976 = vunpack.c.l.b16 %v960
        %v977 = vunpack.c.l.b16 %v961
        %v978 = vunpack.c.l.b16 %v962
        %v979 = vunpack.c.l.b16 %v963
        %v980 = vpack.c.b16 %v977, %v976
        %v981 = vpack.c.b16 %v979, %v978
        %984 = vmatprep.subr.bf16.mxu0 0
        %985 = vmatpush1.bf16.msra.mxu0 0
        %986 = vmatprep.subr.bf16.mxu0 0
        %987 = vmatpush1.bf16.msra.mxu0 0
        %988 = vmatprep.subr.bf16.mxu0 0
        %989 = vmatpush1.bf16.msra.mxu0 0
        %990 = vmatprep.subr.bf16.mxu0 0
        %991 = vmatpush1.bf16.msra.mxu0 0
        %992 = vmatprep.subr.bf16.mxu0 0
        %993 = vmatpush1.bf16.msra.mxu0 0
        %994 = vmatprep.subr.bf16.mxu0 0
        %995 = vmatpush1.bf16.msra.mxu0 0
        %996 = vmatprep.subr.bf16.mxu0 0
        %997 = vmatpush1.bf16.msra.mxu0 %v981
        %998 = vmatprep.subr.bf16.mxu0 0
        %999 = vmatpush1.bf16.msra.mxu0 %v980
        %1000 = vmatprep.subr.bf16.mxu0 0
        %1001 = vmatpush2.bf16.msra.mxu0 0
        %1002 = vmatprep.subr.bf16.mxu0 0
        %1003 = vmatpush2.bf16.msra.mxu0 0
        %1004 = vmatprep.subr.bf16.mxu0 0
        %1005 = vmatpush2.bf16.msra.mxu0 0
        %1006 = vmatprep.subr.bf16.mxu0 0
        %1007 = vmatpush2.bf16.msra.mxu0 0
        %1008 = vmatprep.subr.bf16.mxu0 0
        %1009 = vmatpush2.bf16.msra.mxu0 0
        %1010 = vmatprep.subr.bf16.mxu0 0
        %1011 = vmatpush2.bf16.msra.mxu0 0
        %1012 = vmatprep.subr.bf16.mxu0 0
        %1013 = vmatpush2.bf16.msra.mxu0 0
        %1014 = vmatprep.subr.bf16.mxu0 0
        %1015 = vmatpush2.bf16.msra.mxu0 0
        %1016 = vmatprep.mubr.bf16.mxu0 0
        %1017 = vmatmul.mubr.bf16.gmra.mxu0 %v917
        %v1018 = vpop.f32.mrf.mxu0
        %v1019 = vadd.f32 %v970, %v1018
        %v1020 = vpop.f32.mrf.mxu0
        %v1021 = vpop.f32.mrf.mxu0
        %v1022 = vpop.f32.mrf.mxu0
        %1023 = vdwg.mxu0
        %v1024 = vpack.c.bf16 %v885, %v885
        %v1025 = vpack.c.bf16 %v954, %v954
        %v1027 = vsel %vm470, %v1024, 0
        %v1030 = vsel %vm470, %v1025, 0
        %1032 = vmatprep.subr.bf16.mxu0 0
        %1033 = vmatpush1.bf16.xpose.msra.mxu0 0
        %1034 = vmatprep.subr.bf16.mxu0 0
        %1035 = vmatpush1.bf16.xpose.msra.mxu0 0
        %1036 = vmatprep.subr.bf16.mxu0 0
        %1037 = vmatpush1.bf16.xpose.msra.mxu0 0
        %1038 = vmatprep.subr.bf16.mxu0 0
        %1039 = vmatpush1.bf16.xpose.msra.mxu0 0
        %1040 = vmatprep.subr.bf16.mxu0 0
        %1041 = vmatpush1.bf16.xpose.msra.mxu0 0
        %1042 = vmatprep.subr.bf16.mxu0 0
        %1043 = vmatpush1.bf16.xpose.msra.mxu0 0
        %1044 = vmatprep.subr.bf16.mxu0 0
        %1045 = vmatpush1.bf16.xpose.msra.mxu0 0
        %1046 = vmatprep.subr.bf16.mxu0 0
        %1047 = vmatpush1.bf16.xpose.msra.mxu0 %v1030
        %1048 = vmatprep.subr.bf16.mxu0 0
        %1049 = vmatpush2.bf16.xpose.msra.mxu0 0
        %1050 = vmatprep.subr.bf16.mxu0 0
        %1051 = vmatpush2.bf16.xpose.msra.mxu0 0
        %1052 = vmatprep.subr.bf16.mxu0 0
        %1053 = vmatpush2.bf16.xpose.msra.mxu0 0
        %1054 = vmatprep.subr.bf16.mxu0 0
        %1055 = vmatpush2.bf16.xpose.msra.mxu0 0
        %1056 = vmatprep.subr.bf16.mxu0 0
        %1057 = vmatpush2.bf16.xpose.msra.mxu0 0
        %1058 = vmatprep.subr.bf16.mxu0 0
        %1059 = vmatpush2.bf16.xpose.msra.mxu0 0
        %1060 = vmatprep.subr.bf16.mxu0 0
        %1061 = vmatpush2.bf16.xpose.msra.mxu0 0
        %1062 = vmatprep.subr.bf16.mxu0 0
        %1063 = vmatpush2.bf16.xpose.msra.mxu0 0
        %1064 = vmatprep.mubr.bf16.mxu0 0
        %1065 = vmatmul.mubr.bf16.gmra.mxu0 %v1027
        %v1066 = vpop.f32.mrf.mxu0
        %v1067 = vadd.f32 0.0, %v1066
        %v1068 = vpop.f32.mrf.mxu0
        %v1069 = vpop.f32.mrf.mxu0
        %v1070 = vpop.f32.mrf.mxu0
        %1071 = vdwg.mxu0
        %v1072 = vmul.f32 %v1067, 0.17677669
        %v1073 = vsel %vm433, 1, 0
        %v1074 = vlaneseq
        %v1075 = vshrl.u32 %v1074, 7
        %v1076 = vsub.s32 0, %v1075
        %v1077 = vrot.slane %v1073, %v1076
        %vm1078 = vcmp.eq.s32.totalorder %v1077, 1
        %v1079 = vsel %vm1078, %v1072, -1e+09
        %v1080 = vsel %vm694, %v1079, -inf
        %1081 = vmax.xlane.f32.xlu0 %v1080
        %v1082 = vpop.xlane.xlu0 %1081
        %v1083 = vsub.f32 %v1079, %v1082
        %v1084 = vmul.f32 %v1083, 1.442695
        %v1085 = vpow.pop %v1084
        %v1086 = vsel %vm694, %v1085, 0.0
        %1087 = vadd.xlane.f32.xlu0 %v1086
        %v1088 = vpop.xlane.xlu0 %1087
        %v1089 = vrcp.pop %v1088
        %v1090 = vmul.f32 %v1085, %v1089
        %v1091 = vpack.c.bf16 %v1090, %v1090
        %v1092 = vpack.c.bf16 %v1019, %v1019
        %v1094 = vsel %vm694, %v1091, 0
        %v1097 = vsel %vm711, %v1092, 0
        %1099 = vmatprep.subr.bf16.mxu0 0
        %1100 = vmatpush1.bf16.msra.mxu0 0
        %1101 = vmatprep.subr.bf16.mxu0 0
        %1102 = vmatpush1.bf16.msra.mxu0 0
        %1103 = vmatprep.subr.bf16.mxu0 0
        %1104 = vmatpush1.bf16.msra.mxu0 0
        %1105 = vmatprep.subr.bf16.mxu0 0
        %1106 = vmatpush1.bf16.msra.mxu0 0
        %1107 = vmatprep.subr.bf16.mxu0 0
        %1108 = vmatpush1.bf16.msra.mxu0 0
        %1109 = vmatprep.subr.bf16.mxu0 0
        %1110 = vmatpush1.bf16.msra.mxu0 0
        %1111 = vmatprep.subr.bf16.mxu0 0
        %1112 = vmatpush1.bf16.msra.mxu0 0
        %1113 = vmatprep.subr.bf16.mxu0 0
        %1114 = vmatpush1.bf16.msra.mxu0 %v1097
        %1115 = vmatprep.subr.bf16.mxu0 0
        %1116 = vmatpush2.bf16.msra.mxu0 0
        %1117 = vmatprep.subr.bf16.mxu0 0
        %1118 = vmatpush2.bf16.msra.mxu0 0
        %1119 = vmatprep.subr.bf16.mxu0 0
        %1120 = vmatpush2.bf16.msra.mxu0 0
        %1121 = vmatprep.subr.bf16.mxu0 0
        %1122 = vmatpush2.bf16.msra.mxu0 0
        %1123 = vmatprep.subr.bf16.mxu0 0
        %1124 = vmatpush2.bf16.msra.mxu0 0
        %1125 = vmatprep.subr.bf16.mxu0 0
        %1126 = vmatpush2.bf16.msra.mxu0 0
        %1127 = vmatprep.subr.bf16.mxu0 0
        %1128 = vmatpush2.bf16.msra.mxu0 0
        %1129 = vmatprep.subr.bf16.mxu0 0
        %1130 = vmatpush2.bf16.msra.mxu0 0
        %1131 = vmatprep.mubr.bf16.mxu0 0
        %1132 = vmatmul.mubr.bf16.gmra.mxu0 %v1094
        %v1133 = vpop.f32.mrf.mxu0
        %v1134 = vadd.f32 0.0, %v1133
        %v1135 = vpop.f32.mrf.mxu0
        %v1136 = vpop.f32.mrf.mxu0
        %v1137 = vpop.f32.mrf.mxu0
        %1138 = vdwg.mxu0
        %s1139 = scalar_lea.vmem %s8, 16
        %v1140 = vld [vmem:[%s1139] sm:$0xf]
        %v1141 = vld [vmem:[%s1139 + $0x4] sm:$0xf]
        %v1142 = vld [vmem:[%s1139 + $0x8] sm:$0xf]
        %v1143 = vld [vmem:[%s1139 + $0xc] sm:$0xf]
        %v1144 = vpack.c.bf16 %v1134, %v1134
        %s1145 = scalar_lea.vmem %s9, 1
        %v1146 = vld [vmem:[%s1145] sm:$0x1]
        %v1148 = vlaneseq
        %v1149 = vshrl.u32 %v1148, 7
        %v1150 = vsub.s32 0, %v1149
        %v1151 = vrot.slane %v1146, %v1150
        %v1157 = vunpack.c.l.b16 %v1140
        %v1158 = vunpack.c.l.b16 %v1141
        %v1159 = vunpack.c.l.b16 %v1142
        %v1160 = vunpack.c.l.b16 %v1143
        %v1161 = vpack.c.b16 %v1158, %v1157
        %v1162 = vpack.c.b16 %v1160, %v1159
        %v1166 = vsel %vm470, %v1144, 0
        %1168 = vmatprep.subr.bf16.mxu0 0
        %1169 = vmatpush1.bf16.msra.mxu0 0
        %1170 = vmatprep.subr.bf16.mxu0 0
        %1171 = vmatpush1.bf16.msra.mxu0 0
        %1172 = vmatprep.subr.bf16.mxu0 0
        %1173 = vmatpush1.bf16.msra.mxu0 0
        %1174 = vmatprep.subr.bf16.mxu0 0
        %1175 = vmatpush1.bf16.msra.mxu0 0
        %1176 = vmatprep.subr.bf16.mxu0 0
        %1177 = vmatpush1.bf16.msra.mxu0 0
        %1178 = vmatprep.subr.bf16.mxu0 0
        %1179 = vmatpush1.bf16.msra.mxu0 0
        %1180 = vmatprep.subr.bf16.mxu0 0
        %1181 = vmatpush1.bf16.msra.mxu0 %v1162
        %1182 = vmatprep.subr.bf16.mxu0 0
        %1183 = vmatpush1.bf16.msra.mxu0 %v1161
        %1184 = vmatprep.subr.bf16.mxu0 0
        %1185 = vmatpush2.bf16.msra.mxu0 0
        %1186 = vmatprep.subr.bf16.mxu0 0
        %1187 = vmatpush2.bf16.msra.mxu0 0
        %1188 = vmatprep.subr.bf16.mxu0 0
        %1189 = vmatpush2.bf16.msra.mxu0 0
        %1190 = vmatprep.subr.bf16.mxu0 0
        %1191 = vmatpush2.bf16.msra.mxu0 0
        %1192 = vmatprep.subr.bf16.mxu0 0
        %1193 = vmatpush2.bf16.msra.mxu0 0
        %1194 = vmatprep.subr.bf16.mxu0 0
        %1195 = vmatpush2.bf16.msra.mxu0 0
        %1196 = vmatprep.subr.bf16.mxu0 0
        %1197 = vmatpush2.bf16.msra.mxu0 0
        %1198 = vmatprep.subr.bf16.mxu0 0
        %1199 = vmatpush2.bf16.msra.mxu0 0
        %1200 = vmatprep.mubr.bf16.mxu0 0
        %1201 = vmatmul.mubr.bf16.gmra.mxu0 %v1166
        %v1202 = vpop.f32.mrf.mxu0
        %v1203 = vadd.f32 %v1151, %v1202
        %v1204 = vpop.f32.mrf.mxu0
        %v1205 = vpop.f32.mrf.mxu0
        %v1206 = vpop.f32.mrf.mxu0
        %1207 = vdwg.mxu0
        %v1208 = vadd.f32 %v1203, %v822
        %v1209 = vsel %vm470, %v1208, 0.0
        %1210 = vadd.xlane.f32.xlu0 %v1209
        %v1211 = vpop.xlane.xlu0 %1210
        %v1212 = vrcp.pop 32.0
        %v1213 = vmul.f32 %v1211, %v1212
        %v1214 = vsub.f32 %v1208, %v1213
        %v1215 = vmul.f32 %v1214, %v1214
        %v1216 = vsel %vm470, %v1215, 0.0
        %1217 = vadd.xlane.f32.xlu0 %v1216
        %v1218 = vpop.xlane.xlu0 %1217
        %v1219 = vmul.f32 %v1218, %v1212
        %v1220 = vadd.f32 %v1219, 1e-05
        %v1221 = vrsqrt.pop %v1220
        %v1222 = vmul.f32 %v1214, %v1221
        %v1223 = vld [vmem:[%s10] sm:$0x1]
        %v1224 = vlaneseq
        %v1225 = vshrl.u32 %v1224, 7
        %v1226 = vsub.s32 0, %v1225
        %v1227 = vrot.slane %v1223, %v1226
        %v1228 = vmul.f32 %v1222, %v1227
        %v1229 = vld [vmem:[%s10 + $0x1] sm:$0x1]
        %v1230 = vlaneseq
        %v1231 = vshrl.u32 %v1230, 7
        %v1232 = vsub.s32 0, %v1231
        %v1233 = vrot.slane %v1229, %v1232
        %v1234 = vadd.f32 %v1228, %v1233
        %s1235 = scalar_lea.vmem %s8, 32
        %v1236 = vld [vmem:[%s1235] sm:$0xf]
        %v1237 = vld [vmem:[%s1235 + $0x4] sm:$0xf]
        %v1238 = vld [vmem:[%s1235 + $0x8] sm:$0xf]
        %v1239 = vld [vmem:[%s1235 + $0xc] sm:$0xf]
        %v1240 = vpack.c.bf16 %v1234, %v1234
        %s1241 = scalar_lea.vmem %s9, 2
        %v1242 = vld [vmem:[%s1241] sm:$0x1]
        %v1244 = vlaneseq
        %v1245 = vshrl.u32 %v1244, 7
        %v1246 = vsub.s32 0, %v1245
        %v1247 = vrot.slane %v1242, %v1246
        %v1253 = vunpack.c.l.b16 %v1236
        %v1254 = vunpack.c.l.b16 %v1237
        %v1255 = vunpack.c.l.b16 %v1238
        %v1256 = vunpack.c.l.b16 %v1239
        %v1257 = vpack.c.b16 %v1254, %v1253
        %v1258 = vpack.c.b16 %v1256, %v1255
        %v1262 = vsel %vm470, %v1240, 0
        %1264 = vmatprep.subr.bf16.mxu0 0
        %1265 = vmatpush1.bf16.msra.mxu0 0
        %1266 = vmatprep.subr.bf16.mxu0 0
        %1267 = vmatpush1.bf16.msra.mxu0 0
        %1268 = vmatprep.subr.bf16.mxu0 0
        %1269 = vmatpush1.bf16.msra.mxu0 0
        %1270 = vmatprep.subr.bf16.mxu0 0
        %1271 = vmatpush1.bf16.msra.mxu0 0
        %1272 = vmatprep.subr.bf16.mxu0 0
        %1273 = vmatpush1.bf16.msra.mxu0 0
        %1274 = vmatprep.subr.bf16.mxu0 0
        %1275 = vmatpush1.bf16.msra.mxu0 0
        %1276 = vmatprep.subr.bf16.mxu0 0
        %1277 = vmatpush1.bf16.msra.mxu0 %v1258
        %1278 = vmatprep.subr.bf16.mxu0 0
        %1279 = vmatpush1.bf16.msra.mxu0 %v1257
        %1280 = vmatprep.subr.bf16.mxu0 0
        %1281 = vmatpush2.bf16.msra.mxu0 0
        %1282 = vmatprep.subr.bf16.mxu0 0
        %1283 = vmatpush2.bf16.msra.mxu0 0
        %1284 = vmatprep.subr.bf16.mxu0 0
        %1285 = vmatpush2.bf16.msra.mxu0 0
        %1286 = vmatprep.subr.bf16.mxu0 0
        %1287 = vmatpush2.bf16.msra.mxu0 0
        %1288 = vmatprep.subr.bf16.mxu0 0
        %1289 = vmatpush2.bf16.msra.mxu0 0
        %1290 = vmatprep.subr.bf16.mxu0 0
        %1291 = vmatpush2.bf16.msra.mxu0 0
        %1292 = vmatprep.subr.bf16.mxu0 0
        %1293 = vmatpush2.bf16.msra.mxu0 0
        %1294 = vmatprep.subr.bf16.mxu0 0
        %1295 = vmatpush2.bf16.msra.mxu0 0
        %1296 = vmatprep.mubr.bf16.mxu0 0
        %1297 = vmatmul.mubr.bf16.gmra.mxu0 %v1262
        %v1298 = vpop.f32.mrf.mxu0
        %v1299 = vadd.f32 %v1247, %v1298
        %v1300 = vpop.f32.mrf.mxu0
        %v1301 = vpop.f32.mrf.mxu0
        %v1302 = vpop.f32.mrf.mxu0
        %1303 = vdwg.mxu0
        %v1304 = vmax.f32 %v1299, 0.0
        %s1305 = scalar_lea.vmem %s8, 48
        %v1306 = vld [vmem:[%s1305] sm:$0xf]
        %v1307 = vld [vmem:[%s1305 + $0x4] sm:$0xf]
        %v1308 = vld [vmem:[%s1305 + $0x8] sm:$0xf]
        %v1309 = vld [vmem:[%s1305 + $0xc] sm:$0xf]
        %v1310 = vpack.c.bf16 %v1304, %v1304
        %s1311 = scalar_lea.vmem %s9, 3
        %v1312 = vld [vmem:[%s1311] sm:$0x1]
        %v1314 = vlaneseq
        %v1315 = vshrl.u32 %v1314, 7
        %v1316 = vsub.s32 0, %v1315
        %v1317 = vrot.slane %v1312, %v1316
        %v1323 = vunpack.c.l.b16 %v1306
        %v1324 = vunpack.c.l.b16 %v1307
        %v1325 = vunpack.c.l.b16 %v1308
        %v1326 = vunpack.c.l.b16 %v1309
        %v1327 = vpack.c.b16 %v1324, %v1323
        %v1328 = vpack.c.b16 %v1326, %v1325
        %v1332 = vsel %vm470, %v1310, 0
        %1334 = vmatprep.subr.bf16.mxu0 0
        %1335 = vmatpush1.bf16.msra.mxu0 0
        %1336 = vmatprep.subr.bf16.mxu0 0
        %1337 = vmatpush1.bf16.msra.mxu0 0
        %1338 = vmatprep.subr.bf16.mxu0 0
        %1339 = vmatpush1.bf16.msra.mxu0 0
        %1340 = vmatprep.subr.bf16.mxu0 0
        %1341 = vmatpush1.bf16.msra.mxu0 0
        %1342 = vmatprep.subr.bf16.mxu0 0
        %1343 = vmatpush1.bf16.msra.mxu0 0
        %1344 = vmatprep.subr.bf16.mxu0 0
        %1345 = vmatpush1.bf16.msra.mxu0 0
        %1346 = vmatprep.subr.bf16.mxu0 0
        %1347 = vmatpush1.bf16.msra.mxu0 %v1328
        %1348 = vmatprep.subr.bf16.mxu0 0
        %1349 = vmatpush1.bf16.msra.mxu0 %v1327
        %1350 = vmatprep.subr.bf16.mxu0 0
        %1351 = vmatpush2.bf16.msra.mxu0 0
        %1352 = vmatprep.subr.bf16.mxu0 0
        %1353 = vmatpush2.bf16.msra.mxu0 0
        %1354 = vmatprep.subr.bf16.mxu0 0
        %1355 = vmatpush2.bf16.msra.mxu0 0
        %1356 = vmatprep.subr.bf16.mxu0 0
        %1357 = vmatpush2.bf16.msra.mxu0 0
        %1358 = vmatprep.subr.bf16.mxu0 0
        %1359 = vmatpush2.bf16.msra.mxu0 0
        %1360 = vmatprep.subr.bf16.mxu0 0
        %1361 = vmatpush2.bf16.msra.mxu0 0
        %1362 = vmatprep.subr.bf16.mxu0 0
        %1363 = vmatpush2.bf16.msra.mxu0 0
        %1364 = vmatprep.subr.bf16.mxu0 0
        %1365 = vmatpush2.bf16.msra.mxu0 0
        %1366 = vmatprep.mubr.bf16.mxu0 0
        %1367 = vmatmul.mubr.bf16.gmra.mxu0 %v1332
        %v1368 = vpop.f32.mrf.mxu0
        %v1369 = vadd.f32 %v1317, %v1368
        %v1370 = vpop.f32.mrf.mxu0
        %v1371 = vpop.f32.mrf.mxu0
        %v1372 = vpop.f32.mrf.mxu0
        %1373 = vdwg.mxu0
        %v1374 = vadd.f32 %v1369, %v1208
        %1375 = vst.msk [vmem:[%s412] sm:$0xff] %vm470, %v1374
        %s1376 = sand.u32 %s284, 1
        %s1377 = scalar_lea.sflag [#allocation3], %s1376
        %s1378 = sand.u32 %s284, 1
        %s1379 = smul.addr %s1378, 8
        %s1380 = scalar_lea.vmem [#allocation2], %s1379
        // Predicated region
        $region65: #{decoder_transformer_layer.1} parent=63 // pred_check
          %p1381 = pneg %p294
        $region66: #{decoder_transformer_layer.1} parent=63 // pred_check_branch
          %1383 = sbr.rel (%p1381) target = $region68
        $region67: #{decoder_transformer_layer.1} parent=63 // pred_region
          %s1385 = ssub.s32 128, 128
          %1386 = vsyncadd %s1377, %s1385
          %s1387 = smul.addr %s25, 128
          %s1388 = scalar_lea.hbm %s11, %s1387
          %s1390 = sshll.u32 %s1380, 4
          %s1391 = int_to_ptr.vmem [resolvable:$true] %s1390
          %1393 = dma.vmem_to_hbm [thread:$0]  %s1391, 128, %s1388, %s1377
        $region68: #{decoder_transformer_layer.1} parent=63 // pred_fallthru
          _
      $region64: #{decoder_transformer_layer.1} parent=5 // pred_fallthru
        _
      %p1394 = scmp.le.s32.totalorder 2, %s20
      // Predicated region
      $region69: #{decoder_transformer_layer.1} parent=5 // pred_check
        %p1395 = pneg %p1394
      $region70: #{decoder_transformer_layer.1} parent=5 // pred_check_branch
        %1397 = sbr.rel (%p1395) target = $region72
      $region71: #{decoder_transformer_layer.1} parent=5 // pred_region
        %s1398 = ssub.s32 %s20, 2
        // Predicated region
        $region73: #{decoder_transformer_layer.1} parent=71 // pred_check
          %p1399 = pneg %p300
        $region74: #{decoder_transformer_layer.1} parent=71 // pred_check_branch
          %1401 = sbr.rel (%p1399) target = $region76
        $region75: #{decoder_transformer_layer.1} parent=71 // pred_region
          %s1402 = sand.u32 %s285, 1
          %s1403 = scalar_lea.sflag [#allocation3], %s1402
          %s1404 = sand.u32 %s285, 1
          %s1405 = smul.addr %s1404, 8
          %s1406 = scalar_lea.vmem [#allocation2], %s1405
          %1407 = dma.done %s1403, 128
        $region76: #{decoder_transformer_layer.1} parent=71 // pred_fallthru
          _
      $region72: #{decoder_transformer_layer.1} parent=5 // pred_fallthru
        _
    $region6: #{decoder_transformer_layer.1} parent=1 // loop_footer
      %s24 = sadd.s32 1, %s20
    $region7: #{decoder_transformer_layer.1} parent=1 // loop_footer_branch
      %19 = sbr.rel target = $region3
    $region8: #{decoder_transformer_layer.1} parent=1 // loop_exit
      _
    %1408 = vsyncpa [#allocation3], 1
    %s1409 = scalar_lea.sflag [#allocation3], 1
    %1410 = vsyncpa %s1409, 1

</llo_original>
